<compile_context>
chip_gen: v7x
topology: tpu7x:2x2x1
jax: 0.10.0
libtpu: 0.0.40
codegen_flags: <defaults>
</compile_context>

<pallas_src>
import functools
import numpy as np
import jax
import jax.numpy as jnp
from jax.experimental import pallas as pl
from jax.experimental.pallas import tpu as pltpu


# ----------------------------------------------------------------------------
# Parameter construction (plain JAX / numpy glue; deterministic, no files)
# ----------------------------------------------------------------------------
def _make_wavelet_basis(N, target_length):
    # TODO(synk): the true db2 phi/psi come from pywt.Wavelet('db2').wavefun(level=10)
    # + scipy interp1d; here we build deterministic synthetic phi/psi on db2's
    # support [0, 3] with the exact same roll-based basis layout used by
    # _AltWaveletGenerator.
    t = np.linspace(0.0, 3.0, N)
    phi = np.exp(-0.5 * ((t - 1.5) / 0.6) ** 2)
    psi = np.sin(2.0 * np.pi * t / 3.0) * np.exp(-0.5 * ((t - 1.5) / 0.8) ** 2)
    W = np.zeros((N, target_length), dtype=np.float32)
    for i in range(target_length):
        if i < target_length // 2:
            W[:, i] = np.roll(phi, i)[:N]
        else:
            W[:, i] = np.roll(psi, i - target_length // 2)[:N]
    return jnp.asarray(W, dtype=jnp.float32)


def _linear_params(key, fan_in, fan_out):
    # PyTorch nn.Linear default init: U(-1/sqrt(fan_in), 1/sqrt(fan_in))
    kw, kb = jax.random.split(key)
    bound = 1.0 / np.sqrt(fan_in)
    W = jax.random.uniform(kw, (fan_in, fan_out), jnp.float32, -bound, bound)
    b = jax.random.uniform(kb, (1, fan_out), jnp.float32, -bound, bound)
    return W, b


def make_db2_alt_wavelet_params(key, units, backcast_length, forecast_length,
                                basis_dim=32, share_weights=False):
    keys = jax.random.split(key, 6)
    p = {}
    p["w1"], p["b1"] = _linear_params(keys[0], backcast_length, units)
    p["w2"], p["b2"] = _linear_params(keys[1], units, units)
    p["w3"], p["b3"] = _linear_params(keys[2], units, units)
    p["w4"], p["b4"] = _linear_params(keys[3], units, units)
    p["wb"], p["bb"] = _linear_params(keys[4], units, basis_dim)
    if share_weights:
        p["wf"], p["bf"] = p["wb"], p["bb"]
    else:
        p["wf"], p["bf"] = _linear_params(keys[5], units, basis_dim)
    p["gb"] = _make_wavelet_basis(basis_dim, backcast_length)
    p["gf"] = _make_wavelet_basis(basis_dim, forecast_length)
    return p


# ----------------------------------------------------------------------------
# Pallas kernel: fused FC stack + single fused (basis-folded, lane-padded) head
# ----------------------------------------------------------------------------
def _db2_kernel(x_ref,
                w1_ref, b1_ref, w2_ref, b2_ref, w3_ref, b3_ref, w4_ref, b4_ref,
                wh_ref, bh_ref,
                out_ref, *, compute_dtype):
    # Matmul operands in compute_dtype (bf16 on the fast path), accumulation +
    # bias + ReLU always in f32.
    x = x_ref[...].astype(compute_dtype)
    h = jnp.dot(x, w1_ref[...], preferred_element_type=jnp.float32) + b1_ref[...]
    h = jnp.maximum(h, 0.0)
    for w_ref, b_ref in ((w2_ref, b2_ref), (w3_ref, b3_ref), (w4_ref, b4_ref)):
        h = jnp.dot(h.astype(compute_dtype), w_ref[...],
                    preferred_element_type=jnp.float32) + b_ref[...]
        h = jnp.maximum(h, 0.0)
    # fused backcast|forecast head (bases already folded in, columns lane-padded)
    out_ref[...] = (jnp.dot(h.astype(compute_dtype), wh_ref[...],
                            preferred_element_type=jnp.float32) + bh_ref[...])


# ----------------------------------------------------------------------------
# Wrapper
# ----------------------------------------------------------------------------
def _round_up(n, m):
    return ((n + m - 1) // m) * m


def _pad2(a, rows, cols):
    """Zero-pad a 2-D array up to (rows, cols)."""
    out = jnp.zeros((rows, cols), a.dtype)
    return out.at[:a.shape[0], :a.shape[1]].set(a)


def _batch_tiling(B):
    """Pick the batch tile size.
    B <= 128: one full tile (rounded to the 8-row sublane granule).
    B  > 128: 128-multiple tiles (v5e MXU granule), chosen so there are >= 2 grid
    steps (v7x megacore) while keeping the tile as large as possible (<= 512) to
    amortize per-step overhead.  No explicit batch padding is done; the grid uses
    cdiv and Pallas masks the partial final block (< 128 rows of waste)."""
    if B <= 128:
        return _round_up(max(B, 8), 8)
    B128 = _round_up(B, 128)
    for t in (512, 256, 128):
        if B128 % t == 0 and B128 // t >= 2:
            return t
    return 128


def db2_alt_wavelet_forward(x, p, use_bf16=False):
    B, L = x.shape
    back_len = p["gb"].shape[1]
    fore_len = p["gf"].shape[1]
    units = p["w1"].shape[1]
    out_w = back_len + fore_len

    U_pad = _round_up(units, 128)        # MXU-aligned hidden width (exact: zero pad)
    out_w_pad = _round_up(out_w, 128)    # lane-dense output width (unmasked stores)
    compute_dtype = jnp.bfloat16 if use_bf16 else jnp.float32

    # Fold wavelet bases into head weights and fuse both heads into one matmul
    # (trace-time JAX ops on tiny matrices; exact algebraic identity).
    w_head = jnp.concatenate([p["wb"] @ p["gb"], p["wf"] @ p["gf"]], axis=1)  # (units, out_w)
    b_head = jnp.concatenate([p["bb"] @ p["gb"], p["bf"] @ p["gf"]], axis=1)  # (1, out_w)

    # Zero-pad feature dims (exact): padded biases are 0 -> relu(0)=0; padded weight
    # rows are 0 -> padded hidden lanes never contaminate real outputs; padded head
    # columns are exactly 0 so the wrapper slice is a pure width change.
    # NOTE: x's last dim (L) is intentionally NOT padded to avoid a full B x L HBM
    # copy in the wrapper; Mosaic handles the small contraction dim of the first dot.
    w1 = _pad2(p["w1"], L, U_pad).astype(compute_dtype)
    w2 = _pad2(p["w2"], U_pad, U_pad).astype(compute_dtype)
    w3 = _pad2(p["w3"], U_pad, U_pad).astype(compute_dtype)
    w4 = _pad2(p["w4"], U_pad, U_pad).astype(compute_dtype)
    wh = _pad2(w_head, U_pad, out_w_pad).astype(compute_dtype)
    b1 = _pad2(p["b1"], 1, U_pad)
    b2 = _pad2(p["b2"], 1, U_pad)
    b3 = _pad2(p["b3"], 1, U_pad)
    b4 = _pad2(p["b4"], 1, U_pad)
    bh = _pad2(b_head, 1, out_w_pad)
    params = [w1, b1, w2, b2, w3, b3, w4, b4, wh, bh]

    tile_b = _batch_tiling(B)
    grid = (pl.cdiv(B, tile_b),)

    # Explicit VMEM budget: double-buffered x/out tiles + resident weights (counted
    # double for the fallback path) + live f32 intermediates, 2x headroom, capped at
    # v7x's 64 MiB physical VMEM.
    dsz = 2 if use_bf16 else 4
    weight_bytes = (dsz * (L * U_pad + 3 * U_pad * U_pad + U_pad * out_w_pad)
                    + 4 * (4 * U_pad + out_w_pad))
    io_bytes = 2 * 4 * tile_b * (L + out_w_pad)
    scratch_bytes = 4 * 4 * tile_b * U_pad
    vmem_limit = int(min(max(2 * (io_bytes + scratch_bytes + 2 * weight_bytes),
                             16 * 1024 * 1024), 64 * 1024 * 1024))

    flops = 2 * B * (L * U_pad + 3 * U_pad * U_pad + U_pad * out_w_pad)
    bytes_accessed = 4 * B * (L + out_w_pad) + weight_bytes
    cost = pl.CostEstimate(flops=flops, transcendentals=0, bytes_accessed=bytes_accessed)

    kernel = functools.partial(_db2_kernel, compute_dtype=compute_dtype)
    out_shape = jax.ShapeDtypeStruct((B, out_w_pad), jnp.float32)
    x_spec = pl.BlockSpec((tile_b, L), lambda i: (i, 0))
    out_spec = pl.BlockSpec((tile_b, out_w_pad), lambda i: (i, 0))

    def _run(single_buffer_weights):
        if single_buffer_weights:
            # Constant index_map -> resident across the grid; single-buffer to halve
            # resident weight VMEM (matters on v7x's 64 MiB / v5e's default 16 MiB).
            def wspec(a):
                return pl.BlockSpec(tuple(a.shape), lambda i: (0, 0),
                                    pipeline_mode=pl.Buffered(buffer_count=1))
        else:
            def wspec(a):
                return pl.BlockSpec(tuple(a.shape), lambda i: (0, 0))
        in_specs = [x_spec] + [wspec(a) for a in params]
        out = pl.pallas_call(
            kernel,
            grid=grid,
            in_specs=in_specs,
            out_specs=out_spec,
            out_shape=out_shape,
            compiler_params=pltpu.CompilerParams(
                dimension_semantics=("parallel",),
                vmem_limit_bytes=vmem_limit),
            cost_estimate=cost,
        )(x, *params)
        return jax.block_until_ready(out)

    try:
        out = _run(True)
    except Exception:
        # Fallback for JAX versions without pipeline_mode / Buffered(1) support.
        out = _run(False)

    back = out[:, :back_len]
    fore = out[:, back_len:back_len + fore_len]
    return back, fore


# ----------------------------------------------------------------------------
# Pure-JAX reference (unfused, matches the PyTorch module structure)
# ----------------------------------------------------------------------------
def _reference_forward(x, p):
    h = jax.nn.relu(x @ p["w1"] + p["b1"])
    h = jax.nn.relu(h @ p["w2"] + p["b2"])
    h = jax.nn.relu(h @ p["w3"] + p["b3"])
    h = jax.nn.relu(h @ p["w4"] + p["b4"])
    b = (h @ p["wb"] + p["bb"]) @ p["gb"]
    f = (h @ p["wf"] + p["bf"]) @ p["gf"]
    return b, f


if __name__ == "__main__":
    # Small shapes consistent with the module's forward: x is [batch, backcast_length]
    batch = 16
    backcast_length = 16
    forecast_length = 8
    units = 32
    basis_dim = 32

    key = jax.random.PRNGKey(0)
    k_params, k_x = jax.random.split(key)

    params = make_db2_alt_wavelet_params(
        k_params, units, backcast_length, forecast_length,
        basis_dim=basis_dim, share_weights=False)

    x = jax.random.normal(k_x, (batch, backcast_length), dtype=jnp.float32)

    # f32 path: matches the unfused reference up to f32 reassociation.
    back, fore = db2_alt_wavelet_forward(x, params, use_bf16=False)
    back = jax.block_until_ready(back)
    fore = jax.block_until_ready(fore)

    back_ref, fore_ref = _reference_forward(x, params)
    np.testing.assert_allclose(np.asarray(back), np.asarray(back_ref), rtol=1e-4, atol=1e-4)
    np.testing.assert_allclose(np.asarray(fore), np.asarray(fore_ref), rtol=1e-4, atol=1e-4)
    assert back.shape == (batch, backcast_length)
    assert fore.shape == (batch, forecast_length)

    # bf16-MXU fast path: same kernel with bf16 matmul operands / f32 accumulation.
    back16, fore16 = db2_alt_wavelet_forward(x, params, use_bf16=True)
    back16 = jax.block_until_ready(back16)
    fore16 = jax.block_until_ready(fore16)
    np.testing.assert_allclose(np.asarray(back16), np.asarray(back_ref), rtol=5e-2, atol=1e-1)
    np.testing.assert_allclose(np.asarray(fore16), np.asarray(fore_ref), rtol=5e-2, atol=1e-1)
    assert back16.shape == (batch, backcast_length)
    assert fore16.shape == (batch, forecast_length)

    print("KERNEL_OK")
</pallas_src>

<mosaic_0001>
module attributes {stable_mosaic.version = 11 : i64} {
  func.func @_db2_kernel(%arg0: i32, %arg1: memref<16x16xf32, #tpu.memory_space<vmem>>, %arg2: memref<16x128xf32, #tpu.memory_space<vmem>>, %arg3: memref<1x128xf32, #tpu.memory_space<vmem>>, %arg4: memref<128x128xf32, #tpu.memory_space<vmem>>, %arg5: memref<1x128xf32, #tpu.memory_space<vmem>>, %arg6: memref<128x128xf32, #tpu.memory_space<vmem>>, %arg7: memref<1x128xf32, #tpu.memory_space<vmem>>, %arg8: memref<128x128xf32, #tpu.memory_space<vmem>>, %arg9: memref<1x128xf32, #tpu.memory_space<vmem>>, %arg10: memref<128x128xf32, #tpu.memory_space<vmem>>, %arg11: memref<1x128xf32, #tpu.memory_space<vmem>>, %arg12: memref<16x128xf32, #tpu.memory_space<vmem>>) attributes {dimension_semantics = [#tpu.dimension_semantics<parallel>], iteration_bounds = array<i64: 1>, scalar_prefetch = 0 : i64, scratch_operands = 0 : i64, tpu.core_type = #tpu.core_type<tc>, window_params = [{transform_indices = @transform_0, window_bounds = array<i64: 16, 16>}, {pipeline_mode = #tpu.pipeline_mode<synchronous>, transform_indices = @transform_1, window_bounds = array<i64: 16, 128>}, {pipeline_mode = #tpu.pipeline_mode<synchronous>, transform_indices = @transform_2, window_bounds = array<i64: 1, 128>}, {pipeline_mode = #tpu.pipeline_mode<synchronous>, transform_indices = @transform_3, window_bounds = array<i64: 128, 128>}, {pipeline_mode = #tpu.pipeline_mode<synchronous>, transform_indices = @transform_4, window_bounds = array<i64: 1, 128>}, {pipeline_mode = #tpu.pipeline_mode<synchronous>, transform_indices = @transform_5, window_bounds = array<i64: 128, 128>}, {pipeline_mode = #tpu.pipeline_mode<synchronous>, transform_indices = @transform_6, window_bounds = array<i64: 1, 128>}, {pipeline_mode = #tpu.pipeline_mode<synchronous>, transform_indices = @transform_7, window_bounds = array<i64: 128, 128>}, {pipeline_mode = #tpu.pipeline_mode<synchronous>, transform_indices = @transform_8, window_bounds = array<i64: 1, 128>}, {pipeline_mode = #tpu.pipeline_mode<synchronous>, transform_indices = @transform_9, window_bounds = array<i64: 128, 128>}, {pipeline_mode = #tpu.pipeline_mode<synchronous>, transform_indices = @transform_10, window_bounds = array<i64: 1, 128>}, {transform_indices = @transform_11, window_bounds = array<i64: 16, 128>}]} {
    %c0 = arith.constant 0 : index
    %c0_0 = arith.constant 0 : index
    %0 = vector.load %arg1[%c0, %c0_0] : memref<16x16xf32, #tpu.memory_space<vmem>>, vector<16x16xf32>
    %c0_1 = arith.constant 0 : index
    %c0_2 = arith.constant 0 : index
    %1 = vector.load %arg2[%c0_1, %c0_2] : memref<16x128xf32, #tpu.memory_space<vmem>>, vector<16x128xf32>
    %cst = arith.constant dense<0.000000e+00> : vector<16x128xf32>
    %2 = tpu.matmul %0, %1, %cst {dimension_numbers = #tpu.dot_dimension_numbers<[1], [0], [0], [1], [0, 0, 1, 1], [], []>} : vector<16x16xf32>, vector<16x128xf32>, vector<16x128xf32> -> vector<16x128xf32>
    %c0_3 = arith.constant 0 : index
    %c0_4 = arith.constant 0 : index
    %3 = vector.load %arg3[%c0_3, %c0_4] : memref<1x128xf32, #tpu.memory_space<vmem>>, vector<1x128xf32>
    %4 = vector.broadcast %3 : vector<1x128xf32> to vector<16x128xf32>
    %5 = arith.addf %2, %4 : vector<16x128xf32>
    %cst_5 = arith.constant 0.000000e+00 : f32
    %6 = vector.broadcast %cst_5 : f32 to vector<16x128xf32>
    %7 = arith.maximumf %5, %6 : vector<16x128xf32>
    %c0_6 = arith.constant 0 : index
    %c0_7 = arith.constant 0 : index
    %8 = vector.load %arg4[%c0_6, %c0_7] : memref<128x128xf32, #tpu.memory_space<vmem>>, vector<128x128xf32>
    %cst_8 = arith.constant dense<0.000000e+00> : vector<16x128xf32>
    %9 = tpu.matmul %7, %8, %cst_8 {dimension_numbers = #tpu.dot_dimension_numbers<[1], [0], [0], [1], [0, 0, 1, 1], [], []>} : vector<16x128xf32>, vector<128x128xf32>, vector<16x128xf32> -> vector<16x128xf32>
    %c0_9 = arith.constant 0 : index
    %c0_10 = arith.constant 0 : index
    %10 = vector.load %arg5[%c0_9, %c0_10] : memref<1x128xf32, #tpu.memory_space<vmem>>, vector<1x128xf32>
    %11 = vector.broadcast %10 : vector<1x128xf32> to vector<16x128xf32>
    %12 = arith.addf %9, %11 : vector<16x128xf32>
    %cst_11 = arith.constant 0.000000e+00 : f32
    %13 = vector.broadcast %cst_11 : f32 to vector<16x128xf32>
    %14 = arith.maximumf %12, %13 : vector<16x128xf32>
    %c0_12 = arith.constant 0 : index
    %c0_13 = arith.constant 0 : index
    %15 = vector.load %arg6[%c0_12, %c0_13] : memref<128x128xf32, #tpu.memory_space<vmem>>, vector<128x128xf32>
    %cst_14 = arith.constant dense<0.000000e+00> : vector<16x128xf32>
    %16 = tpu.matmul %14, %15, %cst_14 {dimension_numbers = #tpu.dot_dimension_numbers<[1], [0], [0], [1], [0, 0, 1, 1], [], []>} : vector<16x128xf32>, vector<128x128xf32>, vector<16x128xf32> -> vector<16x128xf32>
    %c0_15 = arith.constant 0 : index
    %c0_16 = arith.constant 0 : index
    %17 = vector.load %arg7[%c0_15, %c0_16] : memref<1x128xf32, #tpu.memory_space<vmem>>, vector<1x128xf32>
    %18 = vector.broadcast %17 : vector<1x128xf32> to vector<16x128xf32>
    %19 = arith.addf %16, %18 : vector<16x128xf32>
    %cst_17 = arith.constant 0.000000e+00 : f32
    %20 = vector.broadcast %cst_17 : f32 to vector<16x128xf32>
    %21 = arith.maximumf %19, %20 : vector<16x128xf32>
    %c0_18 = arith.constant 0 : index
    %c0_19 = arith.constant 0 : index
    %22 = vector.load %arg8[%c0_18, %c0_19] : memref<128x128xf32, #tpu.memory_space<vmem>>, vector<128x128xf32>
    %cst_20 = arith.constant dense<0.000000e+00> : vector<16x128xf32>
    %23 = tpu.matmul %21, %22, %cst_20 {dimension_numbers = #tpu.dot_dimension_numbers<[1], [0], [0], [1], [0, 0, 1, 1], [], []>} : vector<16x128xf32>, vector<128x128xf32>, vector<16x128xf32> -> vector<16x128xf32>
    %c0_21 = arith.constant 0 : index
    %c0_22 = arith.constant 0 : index
    %24 = vector.load %arg9[%c0_21, %c0_22] : memref<1x128xf32, #tpu.memory_space<vmem>>, vector<1x128xf32>
    %25 = vector.broadcast %24 : vector<1x128xf32> to vector<16x128xf32>
    %26 = arith.addf %23, %25 : vector<16x128xf32>
    %cst_23 = arith.constant 0.000000e+00 : f32
    %27 = vector.broadcast %cst_23 : f32 to vector<16x128xf32>
    %28 = arith.maximumf %26, %27 : vector<16x128xf32>
    %c0_24 = arith.constant 0 : index
    %c0_25 = arith.constant 0 : index
    %29 = vector.load %arg10[%c0_24, %c0_25] : memref<128x128xf32, #tpu.memory_space<vmem>>, vector<128x128xf32>
    %cst_26 = arith.constant dense<0.000000e+00> : vector<16x128xf32>
    %30 = tpu.matmul %28, %29, %cst_26 {dimension_numbers = #tpu.dot_dimension_numbers<[1], [0], [0], [1], [0, 0, 1, 1], [], []>} : vector<16x128xf32>, vector<128x128xf32>, vector<16x128xf32> -> vector<16x128xf32>
    %c0_27 = arith.constant 0 : index
    %c0_28 = arith.constant 0 : index
    %31 = vector.load %arg11[%c0_27, %c0_28] : memref<1x128xf32, #tpu.memory_space<vmem>>, vector<1x128xf32>
    %32 = vector.broadcast %31 : vector<1x128xf32> to vector<16x128xf32>
    %33 = arith.addf %30, %32 : vector<16x128xf32>
    %c0_29 = arith.constant 0 : index
    %c0_30 = arith.constant 0 : index
    %34 = vector.load %arg12[%c0_29, %c0_30] : memref<16x128xf32, #tpu.memory_space<vmem>>, vector<16x128xf32>
    tpu.vector_store %arg12[%c0_29, %c0_30], %33 {strides = array<i32>} : memref<16x128xf32, #tpu.memory_space<vmem>>, vector<16x128xf32>,
    return
  }
  func.func @transform_0(%arg0: i32) -> (i32, i32) {
    %c0_i32 = arith.constant 0 : i32
    %c0_i32_0 = arith.constant 0 : i32
    return %arg0, %c0_i32 : i32, i32
  }
  func.func @transform_1(%arg0: i32) -> (i32, i32) {
    %c0_i32 = arith.constant 0 : i32
    %c0_i32_0 = arith.constant 0 : i32
    %c0_i32_1 = arith.constant 0 : i32
    return %c0_i32, %c0_i32_0 : i32, i32
  }
  func.func @transform_2(%arg0: i32) -> (i32, i32) {
    %c0_i32 = arith.constant 0 : i32
    %c0_i32_0 = arith.constant 0 : i32
    %c0_i32_1 = arith.constant 0 : i32
    return %c0_i32, %c0_i32_0 : i32, i32
  }
  func.func @transform_3(%arg0: i32) -> (i32, i32) {
    %c0_i32 = arith.constant 0 : i32
    %c0_i32_0 = arith.constant 0 : i32
    %c0_i32_1 = arith.constant 0 : i32
    return %c0_i32, %c0_i32_0 : i32, i32
  }
  func.func @transform_4(%arg0: i32) -> (i32, i32) {
    %c0_i32 = arith.constant 0 : i32
    %c0_i32_0 = arith.constant 0 : i32
    %c0_i32_1 = arith.constant 0 : i32
    return %c0_i32, %c0_i32_0 : i32, i32
  }
  func.func @transform_5(%arg0: i32) -> (i32, i32) {
    %c0_i32 = arith.constant 0 : i32
    %c0_i32_0 = arith.constant 0 : i32
    %c0_i32_1 = arith.constant 0 : i32
    return %c0_i32, %c0_i32_0 : i32, i32
  }
  func.func @transform_6(%arg0: i32) -> (i32, i32) {
    %c0_i32 = arith.constant 0 : i32
    %c0_i32_0 = arith.constant 0 : i32
    %c0_i32_1 = arith.constant 0 : i32
    return %c0_i32, %c0_i32_0 : i32, i32
  }
  func.func @transform_7(%arg0: i32) -> (i32, i32) {
    %c0_i32 = arith.constant 0 : i32
    %c0_i32_0 = arith.constant 0 : i32
    %c0_i32_1 = arith.constant 0 : i32
    return %c0_i32, %c0_i32_0 : i32, i32
  }
  func.func @transform_8(%arg0: i32) -> (i32, i32) {
    %c0_i32 = arith.constant 0 : i32
    %c0_i32_0 = arith.constant 0 : i32
    %c0_i32_1 = arith.constant 0 : i32
    return %c0_i32, %c0_i32_0 : i32, i32
  }
  func.func @transform_9(%arg0: i32) -> (i32, i32) {
    %c0_i32 = arith.constant 0 : i32
    %c0_i32_0 = arith.constant 0 : i32
    %c0_i32_1 = arith.constant 0 : i32
    return %c0_i32, %c0_i32_0 : i32, i32
  }
  func.func @transform_10(%arg0: i32) -> (i32, i32) {
    %c0_i32 = arith.constant 0 : i32
    %c0_i32_0 = arith.constant 0 : i32
    %c0_i32_1 = arith.constant 0 : i32
    return %c0_i32, %c0_i32_0 : i32, i32
  }
  func.func @transform_11(%arg0: i32) -> (i32, i32) {
    %c0_i32 = arith.constant 0 : i32
    %c0_i32_0 = arith.constant 0 : i32
    return %arg0, %c0_i32 : i32, i32
  }
}

module attributes {stable_mosaic.version = 11 : i64} {
  func.func @_db2_kernel(%arg0: i32, %arg1: memref<16x16xf32, #tpu.memory_space<vmem>>, %arg2: memref<16x128xf32, #tpu.memory_space<vmem>>, %arg3: memref<1x128xf32, #tpu.memory_space<vmem>>, %arg4: memref<128x128xf32, #tpu.memory_space<vmem>>, %arg5: memref<1x128xf32, #tpu.memory_space<vmem>>, %arg6: memref<128x128xf32, #tpu.memory_space<vmem>>, %arg7: memref<1x128xf32, #tpu.memory_space<vmem>>, %arg8: memref<128x128xf32, #tpu.memory_space<vmem>>, %arg9: memref<1x128xf32, #tpu.memory_space<vmem>>, %arg10: memref<128x128xf32, #tpu.memory_space<vmem>>, %arg11: memref<1x128xf32, #tpu.memory_space<vmem>>, %arg12: memref<16x128xf32, #tpu.memory_space<vmem>>) attributes {dimension_semantics = [#tpu.dimension_semantics<parallel>], iteration_bounds = array<i64: 1>, scalar_prefetch = 0 : i64, scratch_operands = 0 : i64, tpu.core_type = #tpu.core_type<tc>, window_params = [{transform_indices = @transform_0, window_bounds = array<i64: 16, 16>}, {pipeline_mode = #tpu.pipeline_mode<synchronous>, transform_indices = @transform_1, window_bounds = array<i64: 16, 128>}, {pipeline_mode = #tpu.pipeline_mode<synchronous>, transform_indices = @transform_2, window_bounds = array<i64: 1, 128>}, {pipeline_mode = #tpu.pipeline_mode<synchronous>, transform_indices = @transform_3, window_bounds = array<i64: 128, 128>}, {pipeline_mode = #tpu.pipeline_mode<synchronous>, transform_indices = @transform_4, window_bounds = array<i64: 1, 128>}, {pipeline_mode = #tpu.pipeline_mode<synchronous>, transform_indices = @transform_5, window_bounds = array<i64: 128, 128>}, {pipeline_mode = #tpu.pipeline_mode<synchronous>, transform_indices = @transform_6, window_bounds = array<i64: 1, 128>}, {pipeline_mode = #tpu.pipeline_mode<synchronous>, transform_indices = @transform_7, window_bounds = array<i64: 128, 128>}, {pipeline_mode = #tpu.pipeline_mode<synchronous>, transform_indices = @transform_8, window_bounds = array<i64: 1, 128>}, {pipeline_mode = #tpu.pipeline_mode<synchronous>, transform_indices = @transform_9, window_bounds = array<i64: 128, 128>}, {pipeline_mode = #tpu.pipeline_mode<synchronous>, transform_indices = @transform_10, window_bounds = array<i64: 1, 128>}, {transform_indices = @transform_11, window_bounds = array<i64: 16, 128>}]} {
    %c0 = arith.constant 0 : index
    %c0_0 = arith.constant 0 : index
    %0 = vector.load %arg1[%c0, %c0_0] : memref<16x16xf32, #tpu.memory_space<vmem>>, vector<16x16xf32>
    %c0_1 = arith.constant 0 : index
    %c0_2 = arith.constant 0 : index
    %1 = vector.load %arg2[%c0_1, %c0_2] : memref<16x128xf32, #tpu.memory_space<vmem>>, vector<16x128xf32>
    %cst = arith.constant dense<0.000000e+00> : vector<16x128xf32>
    %2 = tpu.matmul %0, %1, %cst {dimension_numbers = #tpu.dot_dimension_numbers<[1], [0], [0], [1], [0, 0, 1, 1], [], []>} : vector<16x16xf32>, vector<16x128xf32>, vector<16x128xf32> -> vector<16x128xf32>
    %c0_3 = arith.constant 0 : index
    %c0_4 = arith.constant 0 : index
    %3 = vector.load %arg3[%c0_3, %c0_4] : memref<1x128xf32, #tpu.memory_space<vmem>>, vector<1x128xf32>
    %4 = vector.broadcast %3 : vector<1x128xf32> to vector<16x128xf32>
    %5 = arith.addf %2, %4 : vector<16x128xf32>
    %cst_5 = arith.constant 0.000000e+00 : f32
    %6 = vector.broadcast %cst_5 : f32 to vector<16x128xf32>
    %7 = arith.maximumf %5, %6 : vector<16x128xf32>
    %c0_6 = arith.constant 0 : index
    %c0_7 = arith.constant 0 : index
    %8 = vector.load %arg4[%c0_6, %c0_7] : memref<128x128xf32, #tpu.memory_space<vmem>>, vector<128x128xf32>
    %cst_8 = arith.constant dense<0.000000e+00> : vector<16x128xf32>
    %9 = tpu.matmul %7, %8, %cst_8 {dimension_numbers = #tpu.dot_dimension_numbers<[1], [0], [0], [1], [0, 0, 1, 1], [], []>} : vector<16x128xf32>, vector<128x128xf32>, vector<16x128xf32> -> vector<16x128xf32>
    %c0_9 = arith.constant 0 : index
    %c0_10 = arith.constant 0 : index
    %10 = vector.load %arg5[%c0_9, %c0_10] : memref<1x128xf32, #tpu.memory_space<vmem>>, vector<1x128xf32>
    %11 = vector.broadcast %10 : vector<1x128xf32> to vector<16x128xf32>
    %12 = arith.addf %9, %11 : vector<16x128xf32>
    %cst_11 = arith.constant 0.000000e+00 : f32
    %13 = vector.broadcast %cst_11 : f32 to vector<16x128xf32>
    %14 = arith.maximumf %12, %13 : vector<16x128xf32>
    %c0_12 = arith.constant 0 : index
    %c0_13 = arith.constant 0 : index
    %15 = vector.load %arg6[%c0_12, %c0_13] : memref<128x128xf32, #tpu.memory_space<vmem>>, vector<128x128xf32>
    %cst_14 = arith.constant dense<0.000000e+00> : vector<16x128xf32>
    %16 = tpu.matmul %14, %15, %cst_14 {dimension_numbers = #tpu.dot_dimension_numbers<[1], [0], [0], [1], [0, 0, 1, 1], [], []>} : vector<16x128xf32>, vector<128x128xf32>, vector<16x128xf32> -> vector<16x128xf32>
    %c0_15 = arith.constant 0 : index
    %c0_16 = arith.constant 0 : index
    %17 = vector.load %arg7[%c0_15, %c0_16] : memref<1x128xf32, #tpu.memory_space<vmem>>, vector<1x128xf32>
    %18 = vector.broadcast %17 : vector<1x128xf32> to vector<16x128xf32>
    %19 = arith.addf %16, %18 : vector<16x128xf32>
    %cst_17 = arith.constant 0.000000e+00 : f32
    %20 = vector.broadcast %cst_17 : f32 to vector<16x128xf32>
    %21 = arith.maximumf %19, %20 : vector<16x128xf32>
    %c0_18 = arith.constant 0 : index
    %c0_19 = arith.constant 0 : index
    %22 = vector.load %arg8[%c0_18, %c0_19] : memref<128x128xf32, #tpu.memory_space<vmem>>, vector<128x128xf32>
    %cst_20 = arith.constant dense<0.000000e+00> : vector<16x128xf32>
    %23 = tpu.matmul %21, %22, %cst_20 {dimension_numbers = #tpu.dot_dimension_numbers<[1], [0], [0], [1], [0, 0, 1, 1], [], []>} : vector<16x128xf32>, vector<128x128xf32>, vector<16x128xf32> -> vector<16x128xf32>
    %c0_21 = arith.constant 0 : index
    %c0_22 = arith.constant 0 : index
    %24 = vector.load %arg9[%c0_21, %c0_22] : memref<1x128xf32, #tpu.memory_space<vmem>>, vector<1x128xf32>
    %25 = vector.broadcast %24 : vector<1x128xf32> to vector<16x128xf32>
    %26 = arith.addf %23, %25 : vector<16x128xf32>
    %cst_23 = arith.constant 0.000000e+00 : f32
    %27 = vector.broadcast %cst_23 : f32 to vector<16x128xf32>
    %28 = arith.maximumf %26, %27 : vector<16x128xf32>
    %c0_24 = arith.constant 0 : index
    %c0_25 = arith.constant 0 : index
    %29 = vector.load %arg10[%c0_24, %c0_25] : memref<128x128xf32, #tpu.memory_space<vmem>>, vector<128x128xf32>
    %cst_26 = arith.constant dense<0.000000e+00> : vector<16x128xf32>
    %30 = tpu.matmul %28, %29, %cst_26 {dimension_numbers = #tpu.dot_dimension_numbers<[1], [0], [0], [1], [0, 0, 1, 1], [], []>} : vector<16x128xf32>, vector<128x128xf32>, vector<16x128xf32> -> vector<16x128xf32>
    %c0_27 = arith.constant 0 : index
    %c0_28 = arith.constant 0 : index
    %31 = vector.load %arg11[%c0_27, %c0_28] : memref<1x128xf32, #tpu.memory_space<vmem>>, vector<1x128xf32>
    %32 = vector.broadcast %31 : vector<1x128xf32> to vector<16x128xf32>
    %33 = arith.addf %30, %32 : vector<16x128xf32>
    %c0_29 = arith.constant 0 : index
    %c0_30 = arith.constant 0 : index
    %34 = vector.load %arg12[%c0_29, %c0_30] : memref<16x128xf32, #tpu.memory_space<vmem>>, vector<16x128xf32>
    tpu.vector_store %arg12[%c0_29, %c0_30], %33 {strides = array<i32>} : memref<16x128xf32, #tpu.memory_space<vmem>>, vector<16x128xf32>,
    return
  }
  func.func @transform_0(%arg0: i32) -> (i32, i32) {
    %c0_i32 = arith.constant 0 : i32
    %c0_i32_0 = arith.constant 0 : i32
    return %arg0, %c0_i32 : i32, i32
  }
  func.func @transform_1(%arg0: i32) -> (i32, i32) {
    %c0_i32 = arith.constant 0 : i32
    %c0_i32_0 = arith.constant 0 : i32
    %c0_i32_1 = arith.constant 0 : i32
    return %c0_i32, %c0_i32_0 : i32, i32
  }
  func.func @transform_2(%arg0: i32) -> (i32, i32) {
    %c0_i32 = arith.constant 0 : i32
    %c0_i32_0 = arith.constant 0 : i32
    %c0_i32_1 = arith.constant 0 : i32
    return %c0_i32, %c0_i32_0 : i32, i32
  }
  func.func @transform_3(%arg0: i32) -> (i32, i32) {
    %c0_i32 = arith.constant 0 : i32
    %c0_i32_0 = arith.constant 0 : i32
    %c0_i32_1 = arith.constant 0 : i32
    return %c0_i32, %c0_i32_0 : i32, i32
  }
  func.func @transform_4(%arg0: i32) -> (i32, i32) {
    %c0_i32 = arith.constant 0 : i32
    %c0_i32_0 = arith.constant 0 : i32
    %c0_i32_1 = arith.constant 0 : i32
    return %c0_i32, %c0_i32_0 : i32, i32
  }
  func.func @transform_5(%arg0: i32) -> (i32, i32) {
    %c0_i32 = arith.constant 0 : i32
    %c0_i32_0 = arith.constant 0 : i32
    %c0_i32_1 = arith.constant 0 : i32
    return %c0_i32, %c0_i32_0 : i32, i32
  }
  func.func @transform_6(%arg0: i32) -> (i32, i32) {
    %c0_i32 = arith.constant 0 : i32
    %c0_i32_0 = arith.constant 0 : i32
    %c0_i32_1 = arith.constant 0 : i32
    return %c0_i32, %c0_i32_0 : i32, i32
  }
  func.func @transform_7(%arg0: i32) -> (i32, i32) {
    %c0_i32 = arith.constant 0 : i32
    %c0_i32_0 = arith.constant 0 : i32
    %c0_i32_1 = arith.constant 0 : i32
    return %c0_i32, %c0_i32_0 : i32, i32
  }
  func.func @transform_8(%arg0: i32) -> (i32, i32) {
    %c0_i32 = arith.constant 0 : i32
    %c0_i32_0 = arith.constant 0 : i32
    %c0_i32_1 = arith.constant 0 : i32
    return %c0_i32, %c0_i32_0 : i32, i32
  }
  func.func @transform_9(%arg0: i32) -> (i32, i32) {
    %c0_i32 = arith.constant 0 : i32
    %c0_i32_0 = arith.constant 0 : i32
    %c0_i32_1 = arith.constant 0 : i32
    return %c0_i32, %c0_i32_0 : i32, i32
  }
  func.func @transform_10(%arg0: i32) -> (i32, i32) {
    %c0_i32 = arith.constant 0 : i32
    %c0_i32_0 = arith.constant 0 : i32
    %c0_i32_1 = arith.constant 0 : i32
    return %c0_i32, %c0_i32_0 : i32, i32
  }
  func.func @transform_11(%arg0: i32) -> (i32, i32) {
    %c0_i32 = arith.constant 0 : i32
    %c0_i32_0 = arith.constant 0 : i32
    return %arg0, %c0_i32 : i32, i32
  }
}

</mosaic_0001>

<llo_original>
// kernel: tpu_custom_call.1
$region0: #{tpu_custom_call.1}
  #allocation0 [shape = 'u32[]', space=smem, size = 0x4, offset = 0x4, fixed_abs, tag = 'smem constant byte address 0x4 - core index']
  #allocation1 [shape = 'u32[144,128]{1,0:T(1,128)}', space=vmem, size = 0x12000, scoped, tag = 'internal scratch']
  %s0 = inlined_call_operand.hbm [shape: f32[16,16], index: 0, kind: input, shape index: {}]
  %s1 = inlined_call_operand.hbm [shape: f32[16,128], index: 1, kind: input, shape index: {}]
  %s2 = inlined_call_operand.vmem [shape: f32[1,128], index: 2, kind: input, shape index: {}]
  %s3 = inlined_call_operand.hbm [shape: f32[128,128], index: 3, kind: input, shape index: {}]
  %s4 = inlined_call_operand.vmem [shape: f32[1,128], index: 4, kind: input, shape index: {}]
  %s5 = inlined_call_operand.hbm [shape: f32[128,128], index: 5, kind: input, shape index: {}]
  %s6 = inlined_call_operand.vmem [shape: f32[1,128], index: 6, kind: input, shape index: {}]
  %s7 = inlined_call_operand.hbm [shape: f32[128,128], index: 7, kind: input, shape index: {}]
  %s8 = inlined_call_operand.vmem [shape: f32[1,128], index: 8, kind: input, shape index: {}]
  %s9 = inlined_call_operand.hbm [shape: f32[128,128], index: 9, kind: input, shape index: {}]
  %s10 = inlined_call_operand.vmem [shape: f32[1,128], index: 10, kind: input, shape index: {}]
  %s11 = inlined_call_operand.hbm [shape: f32[16,128], index: 11, kind: output, shape index: {}]
  %s12 = sld [smem:[#allocation0]]
  $region78: #{tpu_custom_call.1} parent=0
    _
  %s14 = ssub.s32 1, %s12
  %s15 = scalar_select 0, %s14, %s12
  $region1: #{tpu_custom_call.1} parent=0
    #allocation2 [shape = 'u8[8192]{0}', space=vmem, size = 0x2000, scoped, tag = 'input window, operand 0, single buffered']
    #allocation3 [shape = 's32[1]{0}', space=sflag, size = 0x4, scoped, tag = 'scoped memory for tpu_custom_call.1']
    #allocation4 [shape = 's32[1]{0}', space=sflag, size = 0x4, scoped, tag = 'scoped memory for tpu_custom_call.1']
    #allocation5 [shape = 'u8[8192]{0}', space=vmem, size = 0x2000, scoped, tag = 'input window, operand 1, single buffered']
    #allocation6 [shape = 's32[1]{0}', space=sflag, size = 0x4, scoped, tag = 'scoped memory for tpu_custom_call.1']
    #allocation7 [shape = 'u8[65536]{0}', space=vmem, size = 0x10000, scoped, tag = 'input window, operand 3, single buffered']
    #allocation8 [shape = 'u8[65536]{0}', space=vmem, size = 0x10000, scoped, tag = 'input window, operand 5, single buffered']
    #allocation9 [shape = 's32[1]{0}', space=sflag, size = 0x4, scoped, tag = 'scoped memory for tpu_custom_call.1']
    #allocation10 [shape = 'u8[65536]{0}', space=vmem, size = 0x10000, scoped, tag = 'input window, operand 7, single buffered']
    #allocation11 [shape = 'u8[65536]{0}', space=vmem, size = 0x10000, scoped, tag = 'input window, operand 9, single buffered']
    #allocation12 [shape = 's32[1]{0}', space=sflag, size = 0x4, scoped, tag = 'scoped memory for tpu_custom_call.1']
    #allocation13 [shape = 'u8[8192]{0}', space=vmem, size = 0x2000, scoped, tag = 'output window, operand 0, single buffered']
    %16 = vsyncpa [#allocation3], 0
    %17 = vsyncpa [#allocation6], 0
    %18 = vsyncpa [#allocation9], 0
    %19 = vsyncpa [#allocation12], 0
    %20 = vsyncpa [#allocation4], 0
    // Predicated region
    $region2: #{tpu_custom_call.1} parent=1 // pred_check
      _
    $region3: #{tpu_custom_call.1} parent=1 // pred_check_branch
      %22 = sbr.rel (0) target = $region5
    $region4: #{tpu_custom_call.1} parent=1 // pred_region
      %s24 = ssub.s32 256, 256
      %25 = vsyncadd [#allocation3], %s24
      %s26 = sshll.u32 [#allocation2], 4
      %s27 = int_to_ptr.vmem [resolvable:$true] %s26
      %32 = dma.hbm_to_vmem [thread:$0]  %s0, 256, %s27, [#allocation3], 128, 128, 8
    $region5: #{tpu_custom_call.1} parent=1 // pred_fallthru
      _
    // Predicated region
    $region6: #{tpu_custom_call.1} parent=1 // pred_check
      _
    $region7: #{tpu_custom_call.1} parent=1 // pred_check_branch
      %34 = sbr.rel (0) target = $region9
    $region8: #{tpu_custom_call.1} parent=1 // pred_region
      %s36 = ssub.s32 256, 256
      %37 = vsyncadd [#allocation6], %s36
      %s38 = sshll.u32 [#allocation5], 4
      %s39 = int_to_ptr.vmem [resolvable:$true] %s38
      %44 = dma.hbm_to_vmem [thread:$0]  %s1, 256, %s39, [#allocation6], 128, 128, 8
    $region9: #{tpu_custom_call.1} parent=1 // pred_fallthru
      _
    // Predicated region
    $region10: #{tpu_custom_call.1} parent=1 // pred_check
      _
    $region11: #{tpu_custom_call.1} parent=1 // pred_check_branch
      %46 = sbr.rel (0) target = $region13
    $region12: #{tpu_custom_call.1} parent=1 // pred_region
      _
    $region13: #{tpu_custom_call.1} parent=1 // pred_fallthru
      _
    // Predicated region
    $region14: #{tpu_custom_call.1} parent=1 // pred_check
      _
    $region15: #{tpu_custom_call.1} parent=1 // pred_check_branch
      %48 = sbr.rel (0) target = $region17
    $region16: #{tpu_custom_call.1} parent=1 // pred_region
      %s50 = ssub.s32 2048, 2048
      %51 = vsyncadd [#allocation6], %s50
      %s52 = sshll.u32 [#allocation7], 4
      %s53 = int_to_ptr.vmem [resolvable:$true] %s52
      %58 = dma.hbm_to_vmem [thread:$0]  %s3, 2048, %s53, [#allocation6], 128, 128, 8
    $region17: #{tpu_custom_call.1} parent=1 // pred_fallthru
      _
    // Predicated region
    $region18: #{tpu_custom_call.1} parent=1 // pred_check
      _
    $region19: #{tpu_custom_call.1} parent=1 // pred_check_branch
      %60 = sbr.rel (0) target = $region21
    $region20: #{tpu_custom_call.1} parent=1 // pred_region
      _
    $region21: #{tpu_custom_call.1} parent=1 // pred_fallthru
      _
    // Predicated region
    $region22: #{tpu_custom_call.1} parent=1 // pred_check
      _
    $region23: #{tpu_custom_call.1} parent=1 // pred_check_branch
      %62 = sbr.rel (0) target = $region25
    $region24: #{tpu_custom_call.1} parent=1 // pred_region
      %s64 = ssub.s32 2048, 2048
      %65 = vsyncadd [#allocation9], %s64
      %s66 = sshll.u32 [#allocation8], 4
      %s67 = int_to_ptr.vmem [resolvable:$true] %s66
      %72 = dma.hbm_to_vmem [thread:$0]  %s5, 2048, %s67, [#allocation9], 128, 128, 8
    $region25: #{tpu_custom_call.1} parent=1 // pred_fallthru
      _
    // Predicated region
    $region26: #{tpu_custom_call.1} parent=1 // pred_check
      _
    $region27: #{tpu_custom_call.1} parent=1 // pred_check_branch
      %74 = sbr.rel (0) target = $region29
    $region28: #{tpu_custom_call.1} parent=1 // pred_region
      _
    $region29: #{tpu_custom_call.1} parent=1 // pred_fallthru
      _
    // Predicated region
    $region30: #{tpu_custom_call.1} parent=1 // pred_check
      _
    $region31: #{tpu_custom_call.1} parent=1 // pred_check_branch
      %76 = sbr.rel (0) target = $region33
    $region32: #{tpu_custom_call.1} parent=1 // pred_region
      %s78 = ssub.s32 2048, 2048
      %79 = vsyncadd [#allocation9], %s78
      %s80 = sshll.u32 [#allocation10], 4
      %s81 = int_to_ptr.vmem [resolvable:$true] %s80
      %86 = dma.hbm_to_vmem [thread:$0]  %s7, 2048, %s81, [#allocation9], 128, 128, 8
    $region33: #{tpu_custom_call.1} parent=1 // pred_fallthru
      _
    // Predicated region
    $region34: #{tpu_custom_call.1} parent=1 // pred_check
      _
    $region35: #{tpu_custom_call.1} parent=1 // pred_check_branch
      %88 = sbr.rel (0) target = $region37
    $region36: #{tpu_custom_call.1} parent=1 // pred_region
      _
    $region37: #{tpu_custom_call.1} parent=1 // pred_fallthru
      _
    // Predicated region
    $region38: #{tpu_custom_call.1} parent=1 // pred_check
      _
    $region39: #{tpu_custom_call.1} parent=1 // pred_check_branch
      %90 = sbr.rel (0) target = $region41
    $region40: #{tpu_custom_call.1} parent=1 // pred_region
      %s92 = ssub.s32 2048, 2048
      %93 = vsyncadd [#allocation12], %s92
      %s94 = sshll.u32 [#allocation11], 4
      %s95 = int_to_ptr.vmem [resolvable:$true] %s94
      %100 = dma.hbm_to_vmem [thread:$0]  %s9, 2048, %s95, [#allocation12], 128, 128, 8
    $region41: #{tpu_custom_call.1} parent=1 // pred_fallthru
      _
    // Predicated region
    $region42: #{tpu_custom_call.1} parent=1 // pred_check
      _
    $region43: #{tpu_custom_call.1} parent=1 // pred_check_branch
      %102 = sbr.rel (0) target = $region45
    $region44: #{tpu_custom_call.1} parent=1 // pred_region
      _
    $region45: #{tpu_custom_call.1} parent=1 // pred_fallthru
      _
    // Predicated region
    $region46: #{tpu_custom_call.1} parent=1 // pred_check
      _
    $region47: #{tpu_custom_call.1} parent=1 // pred_check_branch
      %104 = sbr.rel (0) target = $region49
    $region48: #{tpu_custom_call.1} parent=1 // pred_region
      %105 = dma.done [#allocation3], 256
    $region49: #{tpu_custom_call.1} parent=1 // pred_fallthru
      _
    // Predicated region
    $region50: #{tpu_custom_call.1} parent=1 // pred_check
      _
    $region51: #{tpu_custom_call.1} parent=1 // pred_check_branch
      %107 = sbr.rel (0) target = $region53
    $region52: #{tpu_custom_call.1} parent=1 // pred_region
      %108 = dma.done [#allocation6], 256
    $region53: #{tpu_custom_call.1} parent=1 // pred_fallthru
      _
    // Predicated region
    $region54: #{tpu_custom_call.1} parent=1 // pred_check
      _
    $region55: #{tpu_custom_call.1} parent=1 // pred_check_branch
      %110 = sbr.rel (0) target = $region57
    $region56: #{tpu_custom_call.1} parent=1 // pred_region
      %111 = dma.done [#allocation6], 2048
    $region57: #{tpu_custom_call.1} parent=1 // pred_fallthru
      _
    // Predicated region
    $region58: #{tpu_custom_call.1} parent=1 // pred_check
      _
    $region59: #{tpu_custom_call.1} parent=1 // pred_check_branch
      %113 = sbr.rel (0) target = $region61
    $region60: #{tpu_custom_call.1} parent=1 // pred_region
      %114 = dma.done [#allocation9], 2048
    $region61: #{tpu_custom_call.1} parent=1 // pred_fallthru
      _
    // Predicated region
    $region62: #{tpu_custom_call.1} parent=1 // pred_check
      _
    $region63: #{tpu_custom_call.1} parent=1 // pred_check_branch
      %116 = sbr.rel (0) target = $region65
    $region64: #{tpu_custom_call.1} parent=1 // pred_region
      %117 = dma.done [#allocation9], 2048
    $region65: #{tpu_custom_call.1} parent=1 // pred_fallthru
      _
    // Predicated region
    $region66: #{tpu_custom_call.1} parent=1 // pred_check
      _
    $region67: #{tpu_custom_call.1} parent=1 // pred_check_branch
      %119 = sbr.rel (0) target = $region69
    $region68: #{tpu_custom_call.1} parent=1 // pred_region
      %120 = dma.done [#allocation12], 2048
    $region69: #{tpu_custom_call.1} parent=1 // pred_fallthru
      _
    %v121 = vld [vmem:[#allocation2] sm:$0xff]
    %v122 = vld [vmem:[#allocation2 + $0x8] sm:$0xff]
    %v123 = vld [vmem:[#allocation5] sm:$0xff]
    %v124 = vld [vmem:[#allocation5 + $0x8] sm:$0xff]
    %v125 = vld [vmem:[%s2] sm:$0x1]
    %v127 = vlaneseq
    %v128 = vshrl.u32 %v127, 7
    %v129 = vsub.s32 0, %v128
    %v130 = vrot.slane %v125, %v129
    %vm132 = vcmask 130048
    %v134 = vsel %vm132, %v121, 0
    %v137 = vsel %vm132, %v122, 0
    %139 = vmatprep.subr.mxu0 0.0
    %140 = vmatpush1.msra.mxu0 %v123
    %141 = vmatprep.subr.mxu0 0.0
    %142 = vmatpush1.msra.mxu0 %v124
    %143 = vmatprep.subr.mxu0 0.0
    %144 = vmatpush1.msra.mxu0 0.0
    %145 = vmatprep.subr.mxu0 0.0
    %146 = vmatpush1.msra.mxu0 0.0
    %147 = vmatprep.subr.mxu0 0.0
    %148 = vmatpush1.msra.mxu0 0.0
    %149 = vmatprep.subr.mxu0 0.0
    %150 = vmatpush1.msra.mxu0 0.0
    %151 = vmatprep.subr.mxu0 0.0
    %152 = vmatpush1.msra.mxu0 0.0
    %153 = vmatprep.subr.mxu0 0.0
    %154 = vmatpush1.msra.mxu0 0.0
    %155 = vmatprep.subr.mxu0 0.0
    %156 = vmatpush1.msra.mxu0 0.0
    %157 = vmatprep.subr.mxu0 0.0
    %158 = vmatpush1.msra.mxu0 0.0
    %159 = vmatprep.subr.mxu0 0.0
    %160 = vmatpush1.msra.mxu0 0.0
    %161 = vmatprep.subr.mxu0 0.0
    %162 = vmatpush1.msra.mxu0 0.0
    %163 = vmatprep.subr.mxu0 0.0
    %164 = vmatpush1.msra.mxu0 0.0
    %165 = vmatprep.subr.mxu0 0.0
    %166 = vmatpush1.msra.mxu0 0.0
    %167 = vmatprep.subr.mxu0 0.0
    %168 = vmatpush1.msra.mxu0 0.0
    %169 = vmatprep.subr.mxu0 0.0
    %170 = vmatpush1.msra.mxu0 0.0
    %171 = vmatprep.subr.mxu0 0.0
    %172 = vmatpush1.msra.mxu0 0.0
    %173 = vmatprep.subr.mxu0 0.0
    %174 = vmatpush1.msra.mxu0 0.0
    %175 = vmatprep.subr.mxu0 0.0
    %176 = vmatpush1.msra.mxu0 0.0
    %177 = vmatprep.subr.mxu0 0.0
    %178 = vmatpush1.msra.mxu0 0.0
    %179 = vmatprep.subr.mxu0 0.0
    %180 = vmatpush1.msra.mxu0 0.0
    %181 = vmatprep.subr.mxu0 0.0
    %182 = vmatpush1.msra.mxu0 0.0
    %183 = vmatprep.subr.mxu0 0.0
    %184 = vmatpush1.msra.mxu0 0.0
    %185 = vmatprep.subr.mxu0 0.0
    %186 = vmatpush1.msra.mxu0 0.0
    %187 = vmatprep.subr.mxu0 0.0
    %188 = vmatpush1.msra.mxu0 0.0
    %189 = vmatprep.subr.mxu0 0.0
    %190 = vmatpush1.msra.mxu0 0.0
    %191 = vmatprep.subr.mxu0 0.0
    %192 = vmatpush1.msra.mxu0 0.0
    %193 = vmatprep.subr.mxu0 0.0
    %194 = vmatpush1.msra.mxu0 0.0
    %195 = vmatprep.subr.mxu0 0.0
    %196 = vmatpush1.msra.mxu0 0.0
    %197 = vmatprep.subr.mxu0 0.0
    %198 = vmatpush1.msra.mxu0 0.0
    %199 = vmatprep.subr.mxu0 0.0
    %200 = vmatpush1.msra.mxu0 0.0
    %201 = vmatprep.subr.mxu0 0.0
    %202 = vmatpush1.msra.mxu0 0.0
    %203 = vmatprep.mubr.f32.mxu0 0.0
    %204 = vmatmul.mubr.f32.gmra.mrb[0].mxu0 %v134
    %v205 = vpop.f32.mrb[0].mxu0
    %v206 = vadd.f32 %v130, %v205
    %v207 = vpop.f32.mrb[0].mxu0
    %208 = vmatprep.mubr.f32.mxu0 0.0
    %209 = vmatmul.mubr.f32.gmra.mrb[0].mxu0 %v137
    %v210 = vpop.f32.mrb[0].mxu0
    %v211 = vadd.f32 %v130, %v210
    %v212 = vpop.f32.mrb[0].mxu0
    %213 = vdwg.mxu0
    %v214 = vmax.f32 %v206, 0.0
    %v215 = vmax.f32 %v211, 0.0
    %v216 = vld [vmem:[#allocation7] sm:$0xff]
    %v217 = vld [vmem:[#allocation7 + $0x8] sm:$0xff]
    %v218 = vld [vmem:[#allocation7 + $0x10] sm:$0xff]
    %v219 = vld [vmem:[#allocation7 + $0x18] sm:$0xff]
    %v220 = vld [vmem:[#allocation7 + $0x20] sm:$0xff]
    %v221 = vld [vmem:[#allocation7 + $0x28] sm:$0xff]
    %v222 = vld [vmem:[#allocation7 + $0x30] sm:$0xff]
    %v223 = vld [vmem:[#allocation7 + $0x38] sm:$0xff]
    %v224 = vld [vmem:[#allocation7 + $0x40] sm:$0xff]
    %v225 = vld [vmem:[#allocation7 + $0x48] sm:$0xff]
    %v226 = vld [vmem:[#allocation7 + $0x50] sm:$0xff]
    %v227 = vld [vmem:[#allocation7 + $0x58] sm:$0xff]
    %v228 = vld [vmem:[#allocation7 + $0x60] sm:$0xff]
    %v229 = vld [vmem:[#allocation7 + $0x68] sm:$0xff]
    %v230 = vld [vmem:[#allocation7 + $0x70] sm:$0xff]
    %v231 = vld [vmem:[#allocation7 + $0x78] sm:$0xff]
    %v232 = vld [vmem:[%s4] sm:$0x1]
    %v234 = vlaneseq
    %v235 = vshrl.u32 %v234, 7
    %v236 = vsub.s32 0, %v235
    %v237 = vrot.slane %v232, %v236
    %239 = vmatprep.subr.mxu0 0.0
    %240 = vmatpush1.msra.mxu0 %v216
    %241 = vmatprep.subr.mxu0 0.0
    %242 = vmatpush1.msra.mxu0 %v217
    %243 = vmatprep.subr.mxu0 0.0
    %244 = vmatpush1.msra.mxu0 %v218
    %245 = vmatprep.subr.mxu0 0.0
    %246 = vmatpush1.msra.mxu0 %v219
    %247 = vmatprep.subr.mxu0 0.0
    %248 = vmatpush1.msra.mxu0 %v220
    %249 = vmatprep.subr.mxu0 0.0
    %250 = vmatpush1.msra.mxu0 %v221
    %251 = vmatprep.subr.mxu0 0.0
    %252 = vmatpush1.msra.mxu0 %v222
    %253 = vmatprep.subr.mxu0 0.0
    %254 = vmatpush1.msra.mxu0 %v223
    %255 = vmatprep.subr.mxu0 0.0
    %256 = vmatpush1.msra.mxu0 %v224
    %257 = vmatprep.subr.mxu0 0.0
    %258 = vmatpush1.msra.mxu0 %v225
    %259 = vmatprep.subr.mxu0 0.0
    %260 = vmatpush1.msra.mxu0 %v226
    %261 = vmatprep.subr.mxu0 0.0
    %262 = vmatpush1.msra.mxu0 %v227
    %263 = vmatprep.subr.mxu0 0.0
    %264 = vmatpush1.msra.mxu0 %v228
    %265 = vmatprep.subr.mxu0 0.0
    %266 = vmatpush1.msra.mxu0 %v229
    %267 = vmatprep.subr.mxu0 0.0
    %268 = vmatpush1.msra.mxu0 %v230
    %269 = vmatprep.subr.mxu0 0.0
    %270 = vmatpush1.msra.mxu0 %v231
    %271 = vmatprep.subr.mxu0 0.0
    %272 = vmatpush1.msra.mxu0 0.0
    %273 = vmatprep.subr.mxu0 0.0
    %274 = vmatpush1.msra.mxu0 0.0
    %275 = vmatprep.subr.mxu0 0.0
    %276 = vmatpush1.msra.mxu0 0.0
    %277 = vmatprep.subr.mxu0 0.0
    %278 = vmatpush1.msra.mxu0 0.0
    %279 = vmatprep.subr.mxu0 0.0
    %280 = vmatpush1.msra.mxu0 0.0
    %281 = vmatprep.subr.mxu0 0.0
    %282 = vmatpush1.msra.mxu0 0.0
    %283 = vmatprep.subr.mxu0 0.0
    %284 = vmatpush1.msra.mxu0 0.0
    %285 = vmatprep.subr.mxu0 0.0
    %286 = vmatpush1.msra.mxu0 0.0
    %287 = vmatprep.subr.mxu0 0.0
    %288 = vmatpush1.msra.mxu0 0.0
    %289 = vmatprep.subr.mxu0 0.0
    %290 = vmatpush1.msra.mxu0 0.0
    %291 = vmatprep.subr.mxu0 0.0
    %292 = vmatpush1.msra.mxu0 0.0
    %293 = vmatprep.subr.mxu0 0.0
    %294 = vmatpush1.msra.mxu0 0.0
    %295 = vmatprep.subr.mxu0 0.0
    %296 = vmatpush1.msra.mxu0 0.0
    %297 = vmatprep.subr.mxu0 0.0
    %298 = vmatpush1.msra.mxu0 0.0
    %299 = vmatprep.subr.mxu0 0.0
    %300 = vmatpush1.msra.mxu0 0.0
    %301 = vmatprep.subr.mxu0 0.0
    %302 = vmatpush1.msra.mxu0 0.0
    %303 = vmatprep.mubr.f32.mxu0 0.0
    %304 = vmatmul.mubr.f32.gmra.mrb[0].mxu0 %v214
    %v305 = vpop.f32.mrb[0].mxu0
    %v306 = vadd.f32 %v237, %v305
    %v307 = vpop.f32.mrb[0].mxu0
    %308 = vmatprep.mubr.f32.mxu0 0.0
    %309 = vmatmul.mubr.f32.gmra.mrb[0].mxu0 %v215
    %v310 = vpop.f32.mrb[0].mxu0
    %v311 = vadd.f32 %v237, %v310
    %v312 = vpop.f32.mrb[0].mxu0
    %313 = vdwg.mxu0
    %v314 = vmax.f32 %v306, 0.0
    %v315 = vmax.f32 %v311, 0.0
    %v316 = vld [vmem:[#allocation8] sm:$0xff]
    %v317 = vld [vmem:[#allocation8 + $0x8] sm:$0xff]
    %v318 = vld [vmem:[#allocation8 + $0x10] sm:$0xff]
    %v319 = vld [vmem:[#allocation8 + $0x18] sm:$0xff]
    %v320 = vld [vmem:[#allocation8 + $0x20] sm:$0xff]
    %v321 = vld [vmem:[#allocation8 + $0x28] sm:$0xff]
    %v322 = vld [vmem:[#allocation8 + $0x30] sm:$0xff]
    %v323 = vld [vmem:[#allocation8 + $0x38] sm:$0xff]
    %v324 = vld [vmem:[#allocation8 + $0x40] sm:$0xff]
    %v325 = vld [vmem:[#allocation8 + $0x48] sm:$0xff]
    %v326 = vld [vmem:[#allocation8 + $0x50] sm:$0xff]
    %v327 = vld [vmem:[#allocation8 + $0x58] sm:$0xff]
    %v328 = vld [vmem:[#allocation8 + $0x60] sm:$0xff]
    %v329 = vld [vmem:[#allocation8 + $0x68] sm:$0xff]
    %v330 = vld [vmem:[#allocation8 + $0x70] sm:$0xff]
    %v331 = vld [vmem:[#allocation8 + $0x78] sm:$0xff]
    %v332 = vld [vmem:[%s6] sm:$0x1]
    %v334 = vlaneseq
    %v335 = vshrl.u32 %v334, 7
    %v336 = vsub.s32 0, %v335
    %v337 = vrot.slane %v332, %v336
    %339 = vmatprep.subr.mxu0 0.0
    %340 = vmatpush1.msra.mxu0 %v316
    %341 = vmatprep.subr.mxu0 0.0
    %342 = vmatpush1.msra.mxu0 %v317
    %343 = vmatprep.subr.mxu0 0.0
    %344 = vmatpush1.msra.mxu0 %v318
    %345 = vmatprep.subr.mxu0 0.0
    %346 = vmatpush1.msra.mxu0 %v319
    %347 = vmatprep.subr.mxu0 0.0
    %348 = vmatpush1.msra.mxu0 %v320
    %349 = vmatprep.subr.mxu0 0.0
    %350 = vmatpush1.msra.mxu0 %v321
    %351 = vmatprep.subr.mxu0 0.0
    %352 = vmatpush1.msra.mxu0 %v322
    %353 = vmatprep.subr.mxu0 0.0
    %354 = vmatpush1.msra.mxu0 %v323
    %355 = vmatprep.subr.mxu0 0.0
    %356 = vmatpush1.msra.mxu0 %v324
    %357 = vmatprep.subr.mxu0 0.0
    %358 = vmatpush1.msra.mxu0 %v325
    %359 = vmatprep.subr.mxu0 0.0
    %360 = vmatpush1.msra.mxu0 %v326
    %361 = vmatprep.subr.mxu0 0.0
    %362 = vmatpush1.msra.mxu0 %v327
    %363 = vmatprep.subr.mxu0 0.0
    %364 = vmatpush1.msra.mxu0 %v328
    %365 = vmatprep.subr.mxu0 0.0
    %366 = vmatpush1.msra.mxu0 %v329
    %367 = vmatprep.subr.mxu0 0.0
    %368 = vmatpush1.msra.mxu0 %v330
    %369 = vmatprep.subr.mxu0 0.0
    %370 = vmatpush1.msra.mxu0 %v331
    %371 = vmatprep.subr.mxu0 0.0
    %372 = vmatpush1.msra.mxu0 0.0
    %373 = vmatprep.subr.mxu0 0.0
    %374 = vmatpush1.msra.mxu0 0.0
    %375 = vmatprep.subr.mxu0 0.0
    %376 = vmatpush1.msra.mxu0 0.0
    %377 = vmatprep.subr.mxu0 0.0
    %378 = vmatpush1.msra.mxu0 0.0
    %379 = vmatprep.subr.mxu0 0.0
    %380 = vmatpush1.msra.mxu0 0.0
    %381 = vmatprep.subr.mxu0 0.0
    %382 = vmatpush1.msra.mxu0 0.0
    %383 = vmatprep.subr.mxu0 0.0
    %384 = vmatpush1.msra.mxu0 0.0
    %385 = vmatprep.subr.mxu0 0.0
    %386 = vmatpush1.msra.mxu0 0.0
    %387 = vmatprep.subr.mxu0 0.0
    %388 = vmatpush1.msra.mxu0 0.0
    %389 = vmatprep.subr.mxu0 0.0
    %390 = vmatpush1.msra.mxu0 0.0
    %391 = vmatprep.subr.mxu0 0.0
    %392 = vmatpush1.msra.mxu0 0.0
    %393 = vmatprep.subr.mxu0 0.0
    %394 = vmatpush1.msra.mxu0 0.0
    %395 = vmatprep.subr.mxu0 0.0
    %396 = vmatpush1.msra.mxu0 0.0
    %397 = vmatprep.subr.mxu0 0.0
    %398 = vmatpush1.msra.mxu0 0.0
    %399 = vmatprep.subr.mxu0 0.0
    %400 = vmatpush1.msra.mxu0 0.0
    %401 = vmatprep.subr.mxu0 0.0
    %402 = vmatpush1.msra.mxu0 0.0
    %403 = vmatprep.mubr.f32.mxu0 0.0
    %404 = vmatmul.mubr.f32.gmra.mrb[0].mxu0 %v314
    %v405 = vpop.f32.mrb[0].mxu0
    %v406 = vadd.f32 %v337, %v405
    %v407 = vpop.f32.mrb[0].mxu0
    %408 = vmatprep.mubr.f32.mxu0 0.0
    %409 = vmatmul.mubr.f32.gmra.mrb[0].mxu0 %v315
    %v410 = vpop.f32.mrb[0].mxu0
    %v411 = vadd.f32 %v337, %v410
    %v412 = vpop.f32.mrb[0].mxu0
    %413 = vdwg.mxu0
    %v414 = vmax.f32 %v406, 0.0
    %v415 = vmax.f32 %v411, 0.0
    %v416 = vld [vmem:[#allocation10] sm:$0xff]
    %v417 = vld [vmem:[#allocation10 + $0x8] sm:$0xff]
    %v418 = vld [vmem:[#allocation10 + $0x10] sm:$0xff]
    %v419 = vld [vmem:[#allocation10 + $0x18] sm:$0xff]
    %v420 = vld [vmem:[#allocation10 + $0x20] sm:$0xff]
    %v421 = vld [vmem:[#allocation10 + $0x28] sm:$0xff]
    %v422 = vld [vmem:[#allocation10 + $0x30] sm:$0xff]
    %v423 = vld [vmem:[#allocation10 + $0x38] sm:$0xff]
    %v424 = vld [vmem:[#allocation10 + $0x40] sm:$0xff]
    %v425 = vld [vmem:[#allocation10 + $0x48] sm:$0xff]
    %v426 = vld [vmem:[#allocation10 + $0x50] sm:$0xff]
    %v427 = vld [vmem:[#allocation10 + $0x58] sm:$0xff]
    %v428 = vld [vmem:[#allocation10 + $0x60] sm:$0xff]
    %v429 = vld [vmem:[#allocation10 + $0x68] sm:$0xff]
    %v430 = vld [vmem:[#allocation10 + $0x70] sm:$0xff]
    %v431 = vld [vmem:[#allocation10 + $0x78] sm:$0xff]
    %v432 = vld [vmem:[%s8] sm:$0x1]
    %v434 = vlaneseq
    %v435 = vshrl.u32 %v434, 7
    %v436 = vsub.s32 0, %v435
    %v437 = vrot.slane %v432, %v436
    %439 = vmatprep.subr.mxu0 0.0
    %440 = vmatpush1.msra.mxu0 %v416
    %441 = vmatprep.subr.mxu0 0.0
    %442 = vmatpush1.msra.mxu0 %v417
    %443 = vmatprep.subr.mxu0 0.0
    %444 = vmatpush1.msra.mxu0 %v418
    %445 = vmatprep.subr.mxu0 0.0
    %446 = vmatpush1.msra.mxu0 %v419
    %447 = vmatprep.subr.mxu0 0.0
    %448 = vmatpush1.msra.mxu0 %v420
    %449 = vmatprep.subr.mxu0 0.0
    %450 = vmatpush1.msra.mxu0 %v421
    %451 = vmatprep.subr.mxu0 0.0
    %452 = vmatpush1.msra.mxu0 %v422
    %453 = vmatprep.subr.mxu0 0.0
    %454 = vmatpush1.msra.mxu0 %v423
    %455 = vmatprep.subr.mxu0 0.0
    %456 = vmatpush1.msra.mxu0 %v424
    %457 = vmatprep.subr.mxu0 0.0
    %458 = vmatpush1.msra.mxu0 %v425
    %459 = vmatprep.subr.mxu0 0.0
    %460 = vmatpush1.msra.mxu0 %v426
    %461 = vmatprep.subr.mxu0 0.0
    %462 = vmatpush1.msra.mxu0 %v427
    %463 = vmatprep.subr.mxu0 0.0
    %464 = vmatpush1.msra.mxu0 %v428
    %465 = vmatprep.subr.mxu0 0.0
    %466 = vmatpush1.msra.mxu0 %v429
    %467 = vmatprep.subr.mxu0 0.0
    %468 = vmatpush1.msra.mxu0 %v430
    %469 = vmatprep.subr.mxu0 0.0
    %470 = vmatpush1.msra.mxu0 %v431
    %471 = vmatprep.subr.mxu0 0.0
    %472 = vmatpush1.msra.mxu0 0.0
    %473 = vmatprep.subr.mxu0 0.0
    %474 = vmatpush1.msra.mxu0 0.0
    %475 = vmatprep.subr.mxu0 0.0
    %476 = vmatpush1.msra.mxu0 0.0
    %477 = vmatprep.subr.mxu0 0.0
    %478 = vmatpush1.msra.mxu0 0.0
    %479 = vmatprep.subr.mxu0 0.0
    %480 = vmatpush1.msra.mxu0 0.0
    %481 = vmatprep.subr.mxu0 0.0
    %482 = vmatpush1.msra.mxu0 0.0
    %483 = vmatprep.subr.mxu0 0.0
    %484 = vmatpush1.msra.mxu0 0.0
    %485 = vmatprep.subr.mxu0 0.0
    %486 = vmatpush1.msra.mxu0 0.0
    %487 = vmatprep.subr.mxu0 0.0
    %488 = vmatpush1.msra.mxu0 0.0
    %489 = vmatprep.subr.mxu0 0.0
    %490 = vmatpush1.msra.mxu0 0.0
    %491 = vmatprep.subr.mxu0 0.0
    %492 = vmatpush1.msra.mxu0 0.0
    %493 = vmatprep.subr.mxu0 0.0
    %494 = vmatpush1.msra.mxu0 0.0
    %495 = vmatprep.subr.mxu0 0.0
    %496 = vmatpush1.msra.mxu0 0.0
    %497 = vmatprep.subr.mxu0 0.0
    %498 = vmatpush1.msra.mxu0 0.0
    %499 = vmatprep.subr.mxu0 0.0
    %500 = vmatpush1.msra.mxu0 0.0
    %501 = vmatprep.subr.mxu0 0.0
    %502 = vmatpush1.msra.mxu0 0.0
    %503 = vmatprep.mubr.f32.mxu0 0.0
    %504 = vmatmul.mubr.f32.gmra.mrb[0].mxu0 %v414
    %v505 = vpop.f32.mrb[0].mxu0
    %v506 = vadd.f32 %v437, %v505
    %v507 = vpop.f32.mrb[0].mxu0
    %508 = vmatprep.mubr.f32.mxu0 0.0
    %509 = vmatmul.mubr.f32.gmra.mrb[0].mxu0 %v415
    %v510 = vpop.f32.mrb[0].mxu0
    %v511 = vadd.f32 %v437, %v510
    %v512 = vpop.f32.mrb[0].mxu0
    %513 = vdwg.mxu0
    %v514 = vmax.f32 %v506, 0.0
    %v515 = vmax.f32 %v511, 0.0
    %v516 = vld [vmem:[#allocation11] sm:$0xff]
    %v517 = vld [vmem:[#allocation11 + $0x8] sm:$0xff]
    %v518 = vld [vmem:[#allocation11 + $0x10] sm:$0xff]
    %v519 = vld [vmem:[#allocation11 + $0x18] sm:$0xff]
    %v520 = vld [vmem:[#allocation11 + $0x20] sm:$0xff]
    %v521 = vld [vmem:[#allocation11 + $0x28] sm:$0xff]
    %v522 = vld [vmem:[#allocation11 + $0x30] sm:$0xff]
    %v523 = vld [vmem:[#allocation11 + $0x38] sm:$0xff]
    %v524 = vld [vmem:[#allocation11 + $0x40] sm:$0xff]
    %v525 = vld [vmem:[#allocation11 + $0x48] sm:$0xff]
    %v526 = vld [vmem:[#allocation11 + $0x50] sm:$0xff]
    %v527 = vld [vmem:[#allocation11 + $0x58] sm:$0xff]
    %v528 = vld [vmem:[#allocation11 + $0x60] sm:$0xff]
    %v529 = vld [vmem:[#allocation11 + $0x68] sm:$0xff]
    %v530 = vld [vmem:[#allocation11 + $0x70] sm:$0xff]
    %v531 = vld [vmem:[#allocation11 + $0x78] sm:$0xff]
    %v532 = vld [vmem:[%s10] sm:$0x1]
    %v534 = vlaneseq
    %v535 = vshrl.u32 %v534, 7
    %v536 = vsub.s32 0, %v535
    %v537 = vrot.slane %v532, %v536
    %539 = vmatprep.subr.mxu0 0.0
    %540 = vmatpush1.msra.mxu0 %v516
    %541 = vmatprep.subr.mxu0 0.0
    %542 = vmatpush1.msra.mxu0 %v517
    %543 = vmatprep.subr.mxu0 0.0
    %544 = vmatpush1.msra.mxu0 %v518
    %545 = vmatprep.subr.mxu0 0.0
    %546 = vmatpush1.msra.mxu0 %v519
    %547 = vmatprep.subr.mxu0 0.0
    %548 = vmatpush1.msra.mxu0 %v520
    %549 = vmatprep.subr.mxu0 0.0
    %550 = vmatpush1.msra.mxu0 %v521
    %551 = vmatprep.subr.mxu0 0.0
    %552 = vmatpush1.msra.mxu0 %v522
    %553 = vmatprep.subr.mxu0 0.0
    %554 = vmatpush1.msra.mxu0 %v523
    %555 = vmatprep.subr.mxu0 0.0
    %556 = vmatpush1.msra.mxu0 %v524
    %557 = vmatprep.subr.mxu0 0.0
    %558 = vmatpush1.msra.mxu0 %v525
    %559 = vmatprep.subr.mxu0 0.0
    %560 = vmatpush1.msra.mxu0 %v526
    %561 = vmatprep.subr.mxu0 0.0
    %562 = vmatpush1.msra.mxu0 %v527
    %563 = vmatprep.subr.mxu0 0.0
    %564 = vmatpush1.msra.mxu0 %v528
    %565 = vmatprep.subr.mxu0 0.0
    %566 = vmatpush1.msra.mxu0 %v529
    %567 = vmatprep.subr.mxu0 0.0
    %568 = vmatpush1.msra.mxu0 %v530
    %569 = vmatprep.subr.mxu0 0.0
    %570 = vmatpush1.msra.mxu0 %v531
    %571 = vmatprep.subr.mxu0 0.0
    %572 = vmatpush1.msra.mxu0 0.0
    %573 = vmatprep.subr.mxu0 0.0
    %574 = vmatpush1.msra.mxu0 0.0
    %575 = vmatprep.subr.mxu0 0.0
    %576 = vmatpush1.msra.mxu0 0.0
    %577 = vmatprep.subr.mxu0 0.0
    %578 = vmatpush1.msra.mxu0 0.0
    %579 = vmatprep.subr.mxu0 0.0
    %580 = vmatpush1.msra.mxu0 0.0
    %581 = vmatprep.subr.mxu0 0.0
    %582 = vmatpush1.msra.mxu0 0.0
    %583 = vmatprep.subr.mxu0 0.0
    %584 = vmatpush1.msra.mxu0 0.0
    %585 = vmatprep.subr.mxu0 0.0
    %586 = vmatpush1.msra.mxu0 0.0
    %587 = vmatprep.subr.mxu0 0.0
    %588 = vmatpush1.msra.mxu0 0.0
    %589 = vmatprep.subr.mxu0 0.0
    %590 = vmatpush1.msra.mxu0 0.0
    %591 = vmatprep.subr.mxu0 0.0
    %592 = vmatpush1.msra.mxu0 0.0
    %593 = vmatprep.subr.mxu0 0.0
    %594 = vmatpush1.msra.mxu0 0.0
    %595 = vmatprep.subr.mxu0 0.0
    %596 = vmatpush1.msra.mxu0 0.0
    %597 = vmatprep.subr.mxu0 0.0
    %598 = vmatpush1.msra.mxu0 0.0
    %599 = vmatprep.subr.mxu0 0.0
    %600 = vmatpush1.msra.mxu0 0.0
    %601 = vmatprep.subr.mxu0 0.0
    %602 = vmatpush1.msra.mxu0 0.0
    %603 = vmatprep.mubr.f32.mxu0 0.0
    %604 = vmatmul.mubr.f32.gmra.mrb[0].mxu0 %v514
    %v605 = vpop.f32.mrb[0].mxu0
    %v606 = vadd.f32 %v537, %v605
    %v607 = vpop.f32.mrb[0].mxu0
    %608 = vmatprep.mubr.f32.mxu0 0.0
    %609 = vmatmul.mubr.f32.gmra.mrb[0].mxu0 %v515
    %v610 = vpop.f32.mrb[0].mxu0
    %v611 = vadd.f32 %v537, %v610
    %v612 = vpop.f32.mrb[0].mxu0
    %613 = vdwg.mxu0
    %614 = vst [vmem:[#allocation13] sm:$0xff] %v606
    %615 = vst [vmem:[#allocation13 + $0x8] sm:$0xff] %v611
    // Predicated region
    $region70: #{tpu_custom_call.1} parent=1 // pred_check
      _
    $region71: #{tpu_custom_call.1} parent=1 // pred_check_branch
      %617 = sbr.rel (0) target = $region73
    $region72: #{tpu_custom_call.1} parent=1 // pred_region
      %s619 = ssub.s32 256, 256
      %620 = vsyncadd [#allocation4], %s619
      %s621 = sshll.u32 [#allocation13], 4
      %s622 = int_to_ptr.vmem [resolvable:$true] %s621
      %627 = dma.vmem_to_hbm [thread:$0]  %s622, 256, %s11, [#allocation4], 128, 128, 8
    $region73: #{tpu_custom_call.1} parent=1 // pred_fallthru
      _
    // Predicated region
    $region74: #{tpu_custom_call.1} parent=1 // pred_check
      _
    $region75: #{tpu_custom_call.1} parent=1 // pred_check_branch
      %629 = sbr.rel (0) target = $region77
    $region76: #{tpu_custom_call.1} parent=1 // pred_region
      %630 = dma.done [#allocation4], 256
    $region77: #{tpu_custom_call.1} parent=1 // pred_fallthru
      _
    %631 = vsyncpa [#allocation3], 1
    %632 = vsyncpa [#allocation6], 1
    %633 = vsyncpa [#allocation9], 1
    %634 = vsyncpa [#allocation12], 1
    %635 = vsyncpa [#allocation4], 1

// kernel: tpu_custom_call.1
$region0: #{tpu_custom_call.1}
  #allocation0 [shape = 'u32[]', space=smem, size = 0x4, offset = 0x4, fixed_abs, tag = 'smem constant byte address 0x4 - core index']
  #allocation1 [shape = 'u32[144,128]{1,0:T(1,128)}', space=vmem, size = 0x12000, scoped, tag = 'internal scratch']
  %s0 = inlined_call_operand.hbm [shape: f32[16,16], index: 0, kind: input, shape index: {}]
  %s1 = inlined_call_operand.hbm [shape: f32[16,128], index: 1, kind: input, shape index: {}]
  %s2 = inlined_call_operand.vmem [shape: f32[1,128], index: 2, kind: input, shape index: {}]
  %s3 = inlined_call_operand.hbm [shape: f32[128,128], index: 3, kind: input, shape index: {}]
  %s4 = inlined_call_operand.vmem [shape: f32[1,128], index: 4, kind: input, shape index: {}]
  %s5 = inlined_call_operand.hbm [shape: f32[128,128], index: 5, kind: input, shape index: {}]
  %s6 = inlined_call_operand.vmem [shape: f32[1,128], index: 6, kind: input, shape index: {}]
  %s7 = inlined_call_operand.hbm [shape: f32[128,128], index: 7, kind: input, shape index: {}]
  %s8 = inlined_call_operand.vmem [shape: f32[1,128], index: 8, kind: input, shape index: {}]
  %s9 = inlined_call_operand.hbm [shape: f32[128,128], index: 9, kind: input, shape index: {}]
  %s10 = inlined_call_operand.vmem [shape: f32[1,128], index: 10, kind: input, shape index: {}]
  %s11 = inlined_call_operand.hbm [shape: f32[16,128], index: 11, kind: output, shape index: {}]
  %s12 = sld [smem:[#allocation0]]
  $region78: #{tpu_custom_call.1} parent=0
    _
  %s14 = ssub.s32 1, %s12
  %s15 = scalar_select 0, %s14, %s12
  $region1: #{tpu_custom_call.1} parent=0
    #allocation2 [shape = 'u8[8192]{0}', space=vmem, size = 0x2000, scoped, tag = 'input window, operand 0, single buffered']
    #allocation3 [shape = 's32[1]{0}', space=sflag, size = 0x4, scoped, tag = 'scoped memory for tpu_custom_call.1']
    #allocation4 [shape = 's32[1]{0}', space=sflag, size = 0x4, scoped, tag = 'scoped memory for tpu_custom_call.1']
    #allocation5 [shape = 'u8[8192]{0}', space=vmem, size = 0x2000, scoped, tag = 'input window, operand 1, single buffered']
    #allocation6 [shape = 's32[1]{0}', space=sflag, size = 0x4, scoped, tag = 'scoped memory for tpu_custom_call.1']
    #allocation7 [shape = 'u8[65536]{0}', space=vmem, size = 0x10000, scoped, tag = 'input window, operand 3, single buffered']
    #allocation8 [shape = 'u8[65536]{0}', space=vmem, size = 0x10000, scoped, tag = 'input window, operand 5, single buffered']
    #allocation9 [shape = 's32[1]{0}', space=sflag, size = 0x4, scoped, tag = 'scoped memory for tpu_custom_call.1']
    #allocation10 [shape = 'u8[65536]{0}', space=vmem, size = 0x10000, scoped, tag = 'input window, operand 7, single buffered']
    #allocation11 [shape = 'u8[65536]{0}', space=vmem, size = 0x10000, scoped, tag = 'input window, operand 9, single buffered']
    #allocation12 [shape = 's32[1]{0}', space=sflag, size = 0x4, scoped, tag = 'scoped memory for tpu_custom_call.1']
    #allocation13 [shape = 'u8[8192]{0}', space=vmem, size = 0x2000, scoped, tag = 'output window, operand 0, single buffered']
    %16 = vsyncpa [#allocation3], 0
    %17 = vsyncpa [#allocation6], 0
    %18 = vsyncpa [#allocation9], 0
    %19 = vsyncpa [#allocation12], 0
    %20 = vsyncpa [#allocation4], 0
    // Predicated region
    $region2: #{tpu_custom_call.1} parent=1 // pred_check
      _
    $region3: #{tpu_custom_call.1} parent=1 // pred_check_branch
      %22 = sbr.rel (0) target = $region5
    $region4: #{tpu_custom_call.1} parent=1 // pred_region
      %s24 = ssub.s32 256, 256
      %25 = vsyncadd [#allocation3], %s24
      %s26 = sshll.u32 [#allocation2], 4
      %s27 = int_to_ptr.vmem [resolvable:$true] %s26
      %32 = dma.hbm_to_vmem [thread:$0]  %s0, 256, %s27, [#allocation3], 128, 128, 8
    $region5: #{tpu_custom_call.1} parent=1 // pred_fallthru
      _
    // Predicated region
    $region6: #{tpu_custom_call.1} parent=1 // pred_check
      _
    $region7: #{tpu_custom_call.1} parent=1 // pred_check_branch
      %34 = sbr.rel (0) target = $region9
    $region8: #{tpu_custom_call.1} parent=1 // pred_region
      %s36 = ssub.s32 256, 256
      %37 = vsyncadd [#allocation6], %s36
      %s38 = sshll.u32 [#allocation5], 4
      %s39 = int_to_ptr.vmem [resolvable:$true] %s38
      %44 = dma.hbm_to_vmem [thread:$0]  %s1, 256, %s39, [#allocation6], 128, 128, 8
    $region9: #{tpu_custom_call.1} parent=1 // pred_fallthru
      _
    // Predicated region
    $region10: #{tpu_custom_call.1} parent=1 // pred_check
      _
    $region11: #{tpu_custom_call.1} parent=1 // pred_check_branch
      %46 = sbr.rel (0) target = $region13
    $region12: #{tpu_custom_call.1} parent=1 // pred_region
      _
    $region13: #{tpu_custom_call.1} parent=1 // pred_fallthru
      _
    // Predicated region
    $region14: #{tpu_custom_call.1} parent=1 // pred_check
      _
    $region15: #{tpu_custom_call.1} parent=1 // pred_check_branch
      %48 = sbr.rel (0) target = $region17
    $region16: #{tpu_custom_call.1} parent=1 // pred_region
      %s50 = ssub.s32 2048, 2048
      %51 = vsyncadd [#allocation6], %s50
      %s52 = sshll.u32 [#allocation7], 4
      %s53 = int_to_ptr.vmem [resolvable:$true] %s52
      %58 = dma.hbm_to_vmem [thread:$0]  %s3, 2048, %s53, [#allocation6], 128, 128, 8
    $region17: #{tpu_custom_call.1} parent=1 // pred_fallthru
      _
    // Predicated region
    $region18: #{tpu_custom_call.1} parent=1 // pred_check
      _
    $region19: #{tpu_custom_call.1} parent=1 // pred_check_branch
      %60 = sbr.rel (0) target = $region21
    $region20: #{tpu_custom_call.1} parent=1 // pred_region
      _
    $region21: #{tpu_custom_call.1} parent=1 // pred_fallthru
      _
    // Predicated region
    $region22: #{tpu_custom_call.1} parent=1 // pred_check
      _
    $region23: #{tpu_custom_call.1} parent=1 // pred_check_branch
      %62 = sbr.rel (0) target = $region25
    $region24: #{tpu_custom_call.1} parent=1 // pred_region
      %s64 = ssub.s32 2048, 2048
      %65 = vsyncadd [#allocation9], %s64
      %s66 = sshll.u32 [#allocation8], 4
      %s67 = int_to_ptr.vmem [resolvable:$true] %s66
      %72 = dma.hbm_to_vmem [thread:$0]  %s5, 2048, %s67, [#allocation9], 128, 128, 8
    $region25: #{tpu_custom_call.1} parent=1 // pred_fallthru
      _
    // Predicated region
    $region26: #{tpu_custom_call.1} parent=1 // pred_check
      _
    $region27: #{tpu_custom_call.1} parent=1 // pred_check_branch
      %74 = sbr.rel (0) target = $region29
    $region28: #{tpu_custom_call.1} parent=1 // pred_region
      _
    $region29: #{tpu_custom_call.1} parent=1 // pred_fallthru
      _
    // Predicated region
    $region30: #{tpu_custom_call.1} parent=1 // pred_check
      _
    $region31: #{tpu_custom_call.1} parent=1 // pred_check_branch
      %76 = sbr.rel (0) target = $region33
    $region32: #{tpu_custom_call.1} parent=1 // pred_region
      %s78 = ssub.s32 2048, 2048
      %79 = vsyncadd [#allocation9], %s78
      %s80 = sshll.u32 [#allocation10], 4
      %s81 = int_to_ptr.vmem [resolvable:$true] %s80
      %86 = dma.hbm_to_vmem [thread:$0]  %s7, 2048, %s81, [#allocation9], 128, 128, 8
    $region33: #{tpu_custom_call.1} parent=1 // pred_fallthru
      _
    // Predicated region
    $region34: #{tpu_custom_call.1} parent=1 // pred_check
      _
    $region35: #{tpu_custom_call.1} parent=1 // pred_check_branch
      %88 = sbr.rel (0) target = $region37
    $region36: #{tpu_custom_call.1} parent=1 // pred_region
      _
    $region37: #{tpu_custom_call.1} parent=1 // pred_fallthru
      _
    // Predicated region
    $region38: #{tpu_custom_call.1} parent=1 // pred_check
      _
    $region39: #{tpu_custom_call.1} parent=1 // pred_check_branch
      %90 = sbr.rel (0) target = $region41
    $region40: #{tpu_custom_call.1} parent=1 // pred_region
      %s92 = ssub.s32 2048, 2048
      %93 = vsyncadd [#allocation12], %s92
      %s94 = sshll.u32 [#allocation11], 4
      %s95 = int_to_ptr.vmem [resolvable:$true] %s94
      %100 = dma.hbm_to_vmem [thread:$0]  %s9, 2048, %s95, [#allocation12], 128, 128, 8
    $region41: #{tpu_custom_call.1} parent=1 // pred_fallthru
      _
    // Predicated region
    $region42: #{tpu_custom_call.1} parent=1 // pred_check
      _
    $region43: #{tpu_custom_call.1} parent=1 // pred_check_branch
      %102 = sbr.rel (0) target = $region45
    $region44: #{tpu_custom_call.1} parent=1 // pred_region
      _
    $region45: #{tpu_custom_call.1} parent=1 // pred_fallthru
      _
    // Predicated region
    $region46: #{tpu_custom_call.1} parent=1 // pred_check
      _
    $region47: #{tpu_custom_call.1} parent=1 // pred_check_branch
      %104 = sbr.rel (0) target = $region49
    $region48: #{tpu_custom_call.1} parent=1 // pred_region
      %105 = dma.done [#allocation3], 256
    $region49: #{tpu_custom_call.1} parent=1 // pred_fallthru
      _
    // Predicated region
    $region50: #{tpu_custom_call.1} parent=1 // pred_check
      _
    $region51: #{tpu_custom_call.1} parent=1 // pred_check_branch
      %107 = sbr.rel (0) target = $region53
    $region52: #{tpu_custom_call.1} parent=1 // pred_region
      %108 = dma.done [#allocation6], 256
    $region53: #{tpu_custom_call.1} parent=1 // pred_fallthru
      _
    // Predicated region
    $region54: #{tpu_custom_call.1} parent=1 // pred_check
      _
    $region55: #{tpu_custom_call.1} parent=1 // pred_check_branch
      %110 = sbr.rel (0) target = $region57
    $region56: #{tpu_custom_call.1} parent=1 // pred_region
      %111 = dma.done [#allocation6], 2048
    $region57: #{tpu_custom_call.1} parent=1 // pred_fallthru
      _
    // Predicated region
    $region58: #{tpu_custom_call.1} parent=1 // pred_check
      _
    $region59: #{tpu_custom_call.1} parent=1 // pred_check_branch
      %113 = sbr.rel (0) target = $region61
    $region60: #{tpu_custom_call.1} parent=1 // pred_region
      %114 = dma.done [#allocation9], 2048
    $region61: #{tpu_custom_call.1} parent=1 // pred_fallthru
      _
    // Predicated region
    $region62: #{tpu_custom_call.1} parent=1 // pred_check
      _
    $region63: #{tpu_custom_call.1} parent=1 // pred_check_branch
      %116 = sbr.rel (0) target = $region65
    $region64: #{tpu_custom_call.1} parent=1 // pred_region
      %117 = dma.done [#allocation9], 2048
    $region65: #{tpu_custom_call.1} parent=1 // pred_fallthru
      _
    // Predicated region
    $region66: #{tpu_custom_call.1} parent=1 // pred_check
      _
    $region67: #{tpu_custom_call.1} parent=1 // pred_check_branch
      %119 = sbr.rel (0) target = $region69
    $region68: #{tpu_custom_call.1} parent=1 // pred_region
      %120 = dma.done [#allocation12], 2048
    $region69: #{tpu_custom_call.1} parent=1 // pred_fallthru
      _
    %v121 = vld [vmem:[#allocation2] sm:$0xff]
    %v122 = vld [vmem:[#allocation2 + $0x8] sm:$0xff]
    %v123 = vld [vmem:[#allocation5] sm:$0xff]
    %v124 = vld [vmem:[#allocation5 + $0x8] sm:$0xff]
    %v125 = vld [vmem:[%s2] sm:$0x1]
    %v127 = vlaneseq
    %v128 = vshrl.u32 %v127, 7
    %v129 = vsub.s32 0, %v128
    %v130 = vrot.slane %v125, %v129
    %vm132 = vcmask 130048
    %v134 = vsel %vm132, %v121, 0
    %v137 = vsel %vm132, %v122, 0
    %139 = vmatprep.subr.mxu0 0.0
    %140 = vmatpush1.msra.mxu0 %v123
    %141 = vmatprep.subr.mxu0 0.0
    %142 = vmatpush1.msra.mxu0 %v124
    %143 = vmatprep.subr.mxu0 0.0
    %144 = vmatpush1.msra.mxu0 0.0
    %145 = vmatprep.subr.mxu0 0.0
    %146 = vmatpush1.msra.mxu0 0.0
    %147 = vmatprep.subr.mxu0 0.0
    %148 = vmatpush1.msra.mxu0 0.0
    %149 = vmatprep.subr.mxu0 0.0
    %150 = vmatpush1.msra.mxu0 0.0
    %151 = vmatprep.subr.mxu0 0.0
    %152 = vmatpush1.msra.mxu0 0.0
    %153 = vmatprep.subr.mxu0 0.0
    %154 = vmatpush1.msra.mxu0 0.0
    %155 = vmatprep.subr.mxu0 0.0
    %156 = vmatpush1.msra.mxu0 0.0
    %157 = vmatprep.subr.mxu0 0.0
    %158 = vmatpush1.msra.mxu0 0.0
    %159 = vmatprep.subr.mxu0 0.0
    %160 = vmatpush1.msra.mxu0 0.0
    %161 = vmatprep.subr.mxu0 0.0
    %162 = vmatpush1.msra.mxu0 0.0
    %163 = vmatprep.subr.mxu0 0.0
    %164 = vmatpush1.msra.mxu0 0.0
    %165 = vmatprep.subr.mxu0 0.0
    %166 = vmatpush1.msra.mxu0 0.0
    %167 = vmatprep.subr.mxu0 0.0
    %168 = vmatpush1.msra.mxu0 0.0
    %169 = vmatprep.subr.mxu0 0.0
    %170 = vmatpush1.msra.mxu0 0.0
    %171 = vmatprep.subr.mxu0 0.0
    %172 = vmatpush1.msra.mxu0 0.0
    %173 = vmatprep.subr.mxu0 0.0
    %174 = vmatpush1.msra.mxu0 0.0
    %175 = vmatprep.subr.mxu0 0.0
    %176 = vmatpush1.msra.mxu0 0.0
    %177 = vmatprep.subr.mxu0 0.0
    %178 = vmatpush1.msra.mxu0 0.0
    %179 = vmatprep.subr.mxu0 0.0
    %180 = vmatpush1.msra.mxu0 0.0
    %181 = vmatprep.subr.mxu0 0.0
    %182 = vmatpush1.msra.mxu0 0.0
    %183 = vmatprep.subr.mxu0 0.0
    %184 = vmatpush1.msra.mxu0 0.0
    %185 = vmatprep.subr.mxu0 0.0
    %186 = vmatpush1.msra.mxu0 0.0
    %187 = vmatprep.subr.mxu0 0.0
    %188 = vmatpush1.msra.mxu0 0.0
    %189 = vmatprep.subr.mxu0 0.0
    %190 = vmatpush1.msra.mxu0 0.0
    %191 = vmatprep.subr.mxu0 0.0
    %192 = vmatpush1.msra.mxu0 0.0
    %193 = vmatprep.subr.mxu0 0.0
    %194 = vmatpush1.msra.mxu0 0.0
    %195 = vmatprep.subr.mxu0 0.0
    %196 = vmatpush1.msra.mxu0 0.0
    %197 = vmatprep.subr.mxu0 0.0
    %198 = vmatpush1.msra.mxu0 0.0
    %199 = vmatprep.subr.mxu0 0.0
    %200 = vmatpush1.msra.mxu0 0.0
    %201 = vmatprep.subr.mxu0 0.0
    %202 = vmatpush1.msra.mxu0 0.0
    %203 = vmatprep.mubr.f32.mxu0 0.0
    %204 = vmatmul.mubr.f32.gmra.mrb[0].mxu0 %v134
    %v205 = vpop.f32.mrb[0].mxu0
    %v206 = vadd.f32 %v130, %v205
    %v207 = vpop.f32.mrb[0].mxu0
    %208 = vmatprep.mubr.f32.mxu0 0.0
    %209 = vmatmul.mubr.f32.gmra.mrb[0].mxu0 %v137
    %v210 = vpop.f32.mrb[0].mxu0
    %v211 = vadd.f32 %v130, %v210
    %v212 = vpop.f32.mrb[0].mxu0
    %213 = vdwg.mxu0
    %v214 = vmax.f32 %v206, 0.0
    %v215 = vmax.f32 %v211, 0.0
    %v216 = vld [vmem:[#allocation7] sm:$0xff]
    %v217 = vld [vmem:[#allocation7 + $0x8] sm:$0xff]
    %v218 = vld [vmem:[#allocation7 + $0x10] sm:$0xff]
    %v219 = vld [vmem:[#allocation7 + $0x18] sm:$0xff]
    %v220 = vld [vmem:[#allocation7 + $0x20] sm:$0xff]
    %v221 = vld [vmem:[#allocation7 + $0x28] sm:$0xff]
    %v222 = vld [vmem:[#allocation7 + $0x30] sm:$0xff]
    %v223 = vld [vmem:[#allocation7 + $0x38] sm:$0xff]
    %v224 = vld [vmem:[#allocation7 + $0x40] sm:$0xff]
    %v225 = vld [vmem:[#allocation7 + $0x48] sm:$0xff]
    %v226 = vld [vmem:[#allocation7 + $0x50] sm:$0xff]
    %v227 = vld [vmem:[#allocation7 + $0x58] sm:$0xff]
    %v228 = vld [vmem:[#allocation7 + $0x60] sm:$0xff]
    %v229 = vld [vmem:[#allocation7 + $0x68] sm:$0xff]
    %v230 = vld [vmem:[#allocation7 + $0x70] sm:$0xff]
    %v231 = vld [vmem:[#allocation7 + $0x78] sm:$0xff]
    %v232 = vld [vmem:[%s4] sm:$0x1]
    %v234 = vlaneseq
    %v235 = vshrl.u32 %v234, 7
    %v236 = vsub.s32 0, %v235
    %v237 = vrot.slane %v232, %v236
    %239 = vmatprep.subr.mxu0 0.0
    %240 = vmatpush1.msra.mxu0 %v216
    %241 = vmatprep.subr.mxu0 0.0
    %242 = vmatpush1.msra.mxu0 %v217
    %243 = vmatprep.subr.mxu0 0.0
    %244 = vmatpush1.msra.mxu0 %v218
    %245 = vmatprep.subr.mxu0 0.0
    %246 = vmatpush1.msra.mxu0 %v219
    %247 = vmatprep.subr.mxu0 0.0
    %248 = vmatpush1.msra.mxu0 %v220
    %249 = vmatprep.subr.mxu0 0.0
    %250 = vmatpush1.msra.mxu0 %v221
    %251 = vmatprep.subr.mxu0 0.0
    %252 = vmatpush1.msra.mxu0 %v222
    %253 = vmatprep.subr.mxu0 0.0
    %254 = vmatpush1.msra.mxu0 %v223
    %255 = vmatprep.subr.mxu0 0.0
    %256 = vmatpush1.msra.mxu0 %v224
    %257 = vmatprep.subr.mxu0 0.0
    %258 = vmatpush1.msra.mxu0 %v225
    %259 = vmatprep.subr.mxu0 0.0
    %260 = vmatpush1.msra.mxu0 %v226
    %261 = vmatprep.subr.mxu0 0.0
    %262 = vmatpush1.msra.mxu0 %v227
    %263 = vmatprep.subr.mxu0 0.0
    %264 = vmatpush1.msra.mxu0 %v228
    %265 = vmatprep.subr.mxu0 0.0
    %266 = vmatpush1.msra.mxu0 %v229
    %267 = vmatprep.subr.mxu0 0.0
    %268 = vmatpush1.msra.mxu0 %v230
    %269 = vmatprep.subr.mxu0 0.0
    %270 = vmatpush1.msra.mxu0 %v231
    %271 = vmatprep.subr.mxu0 0.0
    %272 = vmatpush1.msra.mxu0 0.0
    %273 = vmatprep.subr.mxu0 0.0
    %274 = vmatpush1.msra.mxu0 0.0
    %275 = vmatprep.subr.mxu0 0.0
    %276 = vmatpush1.msra.mxu0 0.0
    %277 = vmatprep.subr.mxu0 0.0
    %278 = vmatpush1.msra.mxu0 0.0
    %279 = vmatprep.subr.mxu0 0.0
    %280 = vmatpush1.msra.mxu0 0.0
    %281 = vmatprep.subr.mxu0 0.0
    %282 = vmatpush1.msra.mxu0 0.0
    %283 = vmatprep.subr.mxu0 0.0
    %284 = vmatpush1.msra.mxu0 0.0
    %285 = vmatprep.subr.mxu0 0.0
    %286 = vmatpush1.msra.mxu0 0.0
    %287 = vmatprep.subr.mxu0 0.0
    %288 = vmatpush1.msra.mxu0 0.0
    %289 = vmatprep.subr.mxu0 0.0
    %290 = vmatpush1.msra.mxu0 0.0
    %291 = vmatprep.subr.mxu0 0.0
    %292 = vmatpush1.msra.mxu0 0.0
    %293 = vmatprep.subr.mxu0 0.0
    %294 = vmatpush1.msra.mxu0 0.0
    %295 = vmatprep.subr.mxu0 0.0
    %296 = vmatpush1.msra.mxu0 0.0
    %297 = vmatprep.subr.mxu0 0.0
    %298 = vmatpush1.msra.mxu0 0.0
    %299 = vmatprep.subr.mxu0 0.0
    %300 = vmatpush1.msra.mxu0 0.0
    %301 = vmatprep.subr.mxu0 0.0
    %302 = vmatpush1.msra.mxu0 0.0
    %303 = vmatprep.mubr.f32.mxu0 0.0
    %304 = vmatmul.mubr.f32.gmra.mrb[0].mxu0 %v214
    %v305 = vpop.f32.mrb[0].mxu0
    %v306 = vadd.f32 %v237, %v305
    %v307 = vpop.f32.mrb[0].mxu0
    %308 = vmatprep.mubr.f32.mxu0 0.0
    %309 = vmatmul.mubr.f32.gmra.mrb[0].mxu0 %v215
    %v310 = vpop.f32.mrb[0].mxu0
    %v311 = vadd.f32 %v237, %v310
    %v312 = vpop.f32.mrb[0].mxu0
    %313 = vdwg.mxu0
    %v314 = vmax.f32 %v306, 0.0
    %v315 = vmax.f32 %v311, 0.0
    %v316 = vld [vmem:[#allocation8] sm:$0xff]
    %v317 = vld [vmem:[#allocation8 + $0x8] sm:$0xff]
    %v318 = vld [vmem:[#allocation8 + $0x10] sm:$0xff]
    %v319 = vld [vmem:[#allocation8 + $0x18] sm:$0xff]
    %v320 = vld [vmem:[#allocation8 + $0x20] sm:$0xff]
    %v321 = vld [vmem:[#allocation8 + $0x28] sm:$0xff]
    %v322 = vld [vmem:[#allocation8 + $0x30] sm:$0xff]
    %v323 = vld [vmem:[#allocation8 + $0x38] sm:$0xff]
    %v324 = vld [vmem:[#allocation8 + $0x40] sm:$0xff]
    %v325 = vld [vmem:[#allocation8 + $0x48] sm:$0xff]
    %v326 = vld [vmem:[#allocation8 + $0x50] sm:$0xff]
    %v327 = vld [vmem:[#allocation8 + $0x58] sm:$0xff]
    %v328 = vld [vmem:[#allocation8 + $0x60] sm:$0xff]
    %v329 = vld [vmem:[#allocation8 + $0x68] sm:$0xff]
    %v330 = vld [vmem:[#allocation8 + $0x70] sm:$0xff]
    %v331 = vld [vmem:[#allocation8 + $0x78] sm:$0xff]
    %v332 = vld [vmem:[%s6] sm:$0x1]
    %v334 = vlaneseq
    %v335 = vshrl.u32 %v334, 7
    %v336 = vsub.s32 0, %v335
    %v337 = vrot.slane %v332, %v336
    %339 = vmatprep.subr.mxu0 0.0
    %340 = vmatpush1.msra.mxu0 %v316
    %341 = vmatprep.subr.mxu0 0.0
    %342 = vmatpush1.msra.mxu0 %v317
    %343 = vmatprep.subr.mxu0 0.0
    %344 = vmatpush1.msra.mxu0 %v318
    %345 = vmatprep.subr.mxu0 0.0
    %346 = vmatpush1.msra.mxu0 %v319
    %347 = vmatprep.subr.mxu0 0.0
    %348 = vmatpush1.msra.mxu0 %v320
    %349 = vmatprep.subr.mxu0 0.0
    %350 = vmatpush1.msra.mxu0 %v321
    %351 = vmatprep.subr.mxu0 0.0
    %352 = vmatpush1.msra.mxu0 %v322
    %353 = vmatprep.subr.mxu0 0.0
    %354 = vmatpush1.msra.mxu0 %v323
    %355 = vmatprep.subr.mxu0 0.0
    %356 = vmatpush1.msra.mxu0 %v324
    %357 = vmatprep.subr.mxu0 0.0
    %358 = vmatpush1.msra.mxu0 %v325
    %359 = vmatprep.subr.mxu0 0.0
    %360 = vmatpush1.msra.mxu0 %v326
    %361 = vmatprep.subr.mxu0 0.0
    %362 = vmatpush1.msra.mxu0 %v327
    %363 = vmatprep.subr.mxu0 0.0
    %364 = vmatpush1.msra.mxu0 %v328
    %365 = vmatprep.subr.mxu0 0.0
    %366 = vmatpush1.msra.mxu0 %v329
    %367 = vmatprep.subr.mxu0 0.0
    %368 = vmatpush1.msra.mxu0 %v330
    %369 = vmatprep.subr.mxu0 0.0
    %370 = vmatpush1.msra.mxu0 %v331
    %371 = vmatprep.subr.mxu0 0.0
    %372 = vmatpush1.msra.mxu0 0.0
    %373 = vmatprep.subr.mxu0 0.0
    %374 = vmatpush1.msra.mxu0 0.0
    %375 = vmatprep.subr.mxu0 0.0
    %376 = vmatpush1.msra.mxu0 0.0
    %377 = vmatprep.subr.mxu0 0.0
    %378 = vmatpush1.msra.mxu0 0.0
    %379 = vmatprep.subr.mxu0 0.0
    %380 = vmatpush1.msra.mxu0 0.0
    %381 = vmatprep.subr.mxu0 0.0
    %382 = vmatpush1.msra.mxu0 0.0
    %383 = vmatprep.subr.mxu0 0.0
    %384 = vmatpush1.msra.mxu0 0.0
    %385 = vmatprep.subr.mxu0 0.0
    %386 = vmatpush1.msra.mxu0 0.0
    %387 = vmatprep.subr.mxu0 0.0
    %388 = vmatpush1.msra.mxu0 0.0
    %389 = vmatprep.subr.mxu0 0.0
    %390 = vmatpush1.msra.mxu0 0.0
    %391 = vmatprep.subr.mxu0 0.0
    %392 = vmatpush1.msra.mxu0 0.0
    %393 = vmatprep.subr.mxu0 0.0
    %394 = vmatpush1.msra.mxu0 0.0
    %395 = vmatprep.subr.mxu0 0.0
    %396 = vmatpush1.msra.mxu0 0.0
    %397 = vmatprep.subr.mxu0 0.0
    %398 = vmatpush1.msra.mxu0 0.0
    %399 = vmatprep.subr.mxu0 0.0
    %400 = vmatpush1.msra.mxu0 0.0
    %401 = vmatprep.subr.mxu0 0.0
    %402 = vmatpush1.msra.mxu0 0.0
    %403 = vmatprep.mubr.f32.mxu0 0.0
    %404 = vmatmul.mubr.f32.gmra.mrb[0].mxu0 %v314
    %v405 = vpop.f32.mrb[0].mxu0
    %v406 = vadd.f32 %v337, %v405
    %v407 = vpop.f32.mrb[0].mxu0
    %408 = vmatprep.mubr.f32.mxu0 0.0
    %409 = vmatmul.mubr.f32.gmra.mrb[0].mxu0 %v315
    %v410 = vpop.f32.mrb[0].mxu0
    %v411 = vadd.f32 %v337, %v410
    %v412 = vpop.f32.mrb[0].mxu0
    %413 = vdwg.mxu0
    %v414 = vmax.f32 %v406, 0.0
    %v415 = vmax.f32 %v411, 0.0
    %v416 = vld [vmem:[#allocation10] sm:$0xff]
    %v417 = vld [vmem:[#allocation10 + $0x8] sm:$0xff]
    %v418 = vld [vmem:[#allocation10 + $0x10] sm:$0xff]
    %v419 = vld [vmem:[#allocation10 + $0x18] sm:$0xff]
    %v420 = vld [vmem:[#allocation10 + $0x20] sm:$0xff]
    %v421 = vld [vmem:[#allocation10 + $0x28] sm:$0xff]
    %v422 = vld [vmem:[#allocation10 + $0x30] sm:$0xff]
    %v423 = vld [vmem:[#allocation10 + $0x38] sm:$0xff]
    %v424 = vld [vmem:[#allocation10 + $0x40] sm:$0xff]
    %v425 = vld [vmem:[#allocation10 + $0x48] sm:$0xff]
    %v426 = vld [vmem:[#allocation10 + $0x50] sm:$0xff]
    %v427 = vld [vmem:[#allocation10 + $0x58] sm:$0xff]
    %v428 = vld [vmem:[#allocation10 + $0x60] sm:$0xff]
    %v429 = vld [vmem:[#allocation10 + $0x68] sm:$0xff]
    %v430 = vld [vmem:[#allocation10 + $0x70] sm:$0xff]
    %v431 = vld [vmem:[#allocation10 + $0x78] sm:$0xff]
    %v432 = vld [vmem:[%s8] sm:$0x1]
    %v434 = vlaneseq
    %v435 = vshrl.u32 %v434, 7
    %v436 = vsub.s32 0, %v435
    %v437 = vrot.slane %v432, %v436
    %439 = vmatprep.subr.mxu0 0.0
    %440 = vmatpush1.msra.mxu0 %v416
    %441 = vmatprep.subr.mxu0 0.0
    %442 = vmatpush1.msra.mxu0 %v417
    %443 = vmatprep.subr.mxu0 0.0
    %444 = vmatpush1.msra.mxu0 %v418
    %445 = vmatprep.subr.mxu0 0.0
    %446 = vmatpush1.msra.mxu0 %v419
    %447 = vmatprep.subr.mxu0 0.0
    %448 = vmatpush1.msra.mxu0 %v420
    %449 = vmatprep.subr.mxu0 0.0
    %450 = vmatpush1.msra.mxu0 %v421
    %451 = vmatprep.subr.mxu0 0.0
    %452 = vmatpush1.msra.mxu0 %v422
    %453 = vmatprep.subr.mxu0 0.0
    %454 = vmatpush1.msra.mxu0 %v423
    %455 = vmatprep.subr.mxu0 0.0
    %456 = vmatpush1.msra.mxu0 %v424
    %457 = vmatprep.subr.mxu0 0.0
    %458 = vmatpush1.msra.mxu0 %v425
    %459 = vmatprep.subr.mxu0 0.0
    %460 = vmatpush1.msra.mxu0 %v426
    %461 = vmatprep.subr.mxu0 0.0
    %462 = vmatpush1.msra.mxu0 %v427
    %463 = vmatprep.subr.mxu0 0.0
    %464 = vmatpush1.msra.mxu0 %v428
    %465 = vmatprep.subr.mxu0 0.0
    %466 = vmatpush1.msra.mxu0 %v429
    %467 = vmatprep.subr.mxu0 0.0
    %468 = vmatpush1.msra.mxu0 %v430
    %469 = vmatprep.subr.mxu0 0.0
    %470 = vmatpush1.msra.mxu0 %v431
    %471 = vmatprep.subr.mxu0 0.0
    %472 = vmatpush1.msra.mxu0 0.0
    %473 = vmatprep.subr.mxu0 0.0
    %474 = vmatpush1.msra.mxu0 0.0
    %475 = vmatprep.subr.mxu0 0.0
    %476 = vmatpush1.msra.mxu0 0.0
    %477 = vmatprep.subr.mxu0 0.0
    %478 = vmatpush1.msra.mxu0 0.0
    %479 = vmatprep.subr.mxu0 0.0
    %480 = vmatpush1.msra.mxu0 0.0
    %481 = vmatprep.subr.mxu0 0.0
    %482 = vmatpush1.msra.mxu0 0.0
    %483 = vmatprep.subr.mxu0 0.0
    %484 = vmatpush1.msra.mxu0 0.0
    %485 = vmatprep.subr.mxu0 0.0
    %486 = vmatpush1.msra.mxu0 0.0
    %487 = vmatprep.subr.mxu0 0.0
    %488 = vmatpush1.msra.mxu0 0.0
    %489 = vmatprep.subr.mxu0 0.0
    %490 = vmatpush1.msra.mxu0 0.0
    %491 = vmatprep.subr.mxu0 0.0
    %492 = vmatpush1.msra.mxu0 0.0
    %493 = vmatprep.subr.mxu0 0.0
    %494 = vmatpush1.msra.mxu0 0.0
    %495 = vmatprep.subr.mxu0 0.0
    %496 = vmatpush1.msra.mxu0 0.0
    %497 = vmatprep.subr.mxu0 0.0
    %498 = vmatpush1.msra.mxu0 0.0
    %499 = vmatprep.subr.mxu0 0.0
    %500 = vmatpush1.msra.mxu0 0.0
    %501 = vmatprep.subr.mxu0 0.0
    %502 = vmatpush1.msra.mxu0 0.0
    %503 = vmatprep.mubr.f32.mxu0 0.0
    %504 = vmatmul.mubr.f32.gmra.mrb[0].mxu0 %v414
    %v505 = vpop.f32.mrb[0].mxu0
    %v506 = vadd.f32 %v437, %v505
    %v507 = vpop.f32.mrb[0].mxu0
    %508 = vmatprep.mubr.f32.mxu0 0.0
    %509 = vmatmul.mubr.f32.gmra.mrb[0].mxu0 %v415
    %v510 = vpop.f32.mrb[0].mxu0
    %v511 = vadd.f32 %v437, %v510
    %v512 = vpop.f32.mrb[0].mxu0
    %513 = vdwg.mxu0
    %v514 = vmax.f32 %v506, 0.0
    %v515 = vmax.f32 %v511, 0.0
    %v516 = vld [vmem:[#allocation11] sm:$0xff]
    %v517 = vld [vmem:[#allocation11 + $0x8] sm:$0xff]
    %v518 = vld [vmem:[#allocation11 + $0x10] sm:$0xff]
    %v519 = vld [vmem:[#allocation11 + $0x18] sm:$0xff]
    %v520 = vld [vmem:[#allocation11 + $0x20] sm:$0xff]
    %v521 = vld [vmem:[#allocation11 + $0x28] sm:$0xff]
    %v522 = vld [vmem:[#allocation11 + $0x30] sm:$0xff]
    %v523 = vld [vmem:[#allocation11 + $0x38] sm:$0xff]
    %v524 = vld [vmem:[#allocation11 + $0x40] sm:$0xff]
    %v525 = vld [vmem:[#allocation11 + $0x48] sm:$0xff]
    %v526 = vld [vmem:[#allocation11 + $0x50] sm:$0xff]
    %v527 = vld [vmem:[#allocation11 + $0x58] sm:$0xff]
    %v528 = vld [vmem:[#allocation11 + $0x60] sm:$0xff]
    %v529 = vld [vmem:[#allocation11 + $0x68] sm:$0xff]
    %v530 = vld [vmem:[#allocation11 + $0x70] sm:$0xff]
    %v531 = vld [vmem:[#allocation11 + $0x78] sm:$0xff]
    %v532 = vld [vmem:[%s10] sm:$0x1]
    %v534 = vlaneseq
    %v535 = vshrl.u32 %v534, 7
    %v536 = vsub.s32 0, %v535
    %v537 = vrot.slane %v532, %v536
    %539 = vmatprep.subr.mxu0 0.0
    %540 = vmatpush1.msra.mxu0 %v516
    %541 = vmatprep.subr.mxu0 0.0
    %542 = vmatpush1.msra.mxu0 %v517
    %543 = vmatprep.subr.mxu0 0.0
    %544 = vmatpush1.msra.mxu0 %v518
    %545 = vmatprep.subr.mxu0 0.0
    %546 = vmatpush1.msra.mxu0 %v519
    %547 = vmatprep.subr.mxu0 0.0
    %548 = vmatpush1.msra.mxu0 %v520
    %549 = vmatprep.subr.mxu0 0.0
    %550 = vmatpush1.msra.mxu0 %v521
    %551 = vmatprep.subr.mxu0 0.0
    %552 = vmatpush1.msra.mxu0 %v522
    %553 = vmatprep.subr.mxu0 0.0
    %554 = vmatpush1.msra.mxu0 %v523
    %555 = vmatprep.subr.mxu0 0.0
    %556 = vmatpush1.msra.mxu0 %v524
    %557 = vmatprep.subr.mxu0 0.0
    %558 = vmatpush1.msra.mxu0 %v525
    %559 = vmatprep.subr.mxu0 0.0
    %560 = vmatpush1.msra.mxu0 %v526
    %561 = vmatprep.subr.mxu0 0.0
    %562 = vmatpush1.msra.mxu0 %v527
    %563 = vmatprep.subr.mxu0 0.0
    %564 = vmatpush1.msra.mxu0 %v528
    %565 = vmatprep.subr.mxu0 0.0
    %566 = vmatpush1.msra.mxu0 %v529
    %567 = vmatprep.subr.mxu0 0.0
    %568 = vmatpush1.msra.mxu0 %v530
    %569 = vmatprep.subr.mxu0 0.0
    %570 = vmatpush1.msra.mxu0 %v531
    %571 = vmatprep.subr.mxu0 0.0
    %572 = vmatpush1.msra.mxu0 0.0
    %573 = vmatprep.subr.mxu0 0.0
    %574 = vmatpush1.msra.mxu0 0.0
    %575 = vmatprep.subr.mxu0 0.0
    %576 = vmatpush1.msra.mxu0 0.0
    %577 = vmatprep.subr.mxu0 0.0
    %578 = vmatpush1.msra.mxu0 0.0
    %579 = vmatprep.subr.mxu0 0.0
    %580 = vmatpush1.msra.mxu0 0.0
    %581 = vmatprep.subr.mxu0 0.0
    %582 = vmatpush1.msra.mxu0 0.0
    %583 = vmatprep.subr.mxu0 0.0
    %584 = vmatpush1.msra.mxu0 0.0
    %585 = vmatprep.subr.mxu0 0.0
    %586 = vmatpush1.msra.mxu0 0.0
    %587 = vmatprep.subr.mxu0 0.0
    %588 = vmatpush1.msra.mxu0 0.0
    %589 = vmatprep.subr.mxu0 0.0
    %590 = vmatpush1.msra.mxu0 0.0
    %591 = vmatprep.subr.mxu0 0.0
    %592 = vmatpush1.msra.mxu0 0.0
    %593 = vmatprep.subr.mxu0 0.0
    %594 = vmatpush1.msra.mxu0 0.0
    %595 = vmatprep.subr.mxu0 0.0
    %596 = vmatpush1.msra.mxu0 0.0
    %597 = vmatprep.subr.mxu0 0.0
    %598 = vmatpush1.msra.mxu0 0.0
    %599 = vmatprep.subr.mxu0 0.0
    %600 = vmatpush1.msra.mxu0 0.0
    %601 = vmatprep.subr.mxu0 0.0
    %602 = vmatpush1.msra.mxu0 0.0
    %603 = vmatprep.mubr.f32.mxu0 0.0
    %604 = vmatmul.mubr.f32.gmra.mrb[0].mxu0 %v514
    %v605 = vpop.f32.mrb[0].mxu0
    %v606 = vadd.f32 %v537, %v605
    %v607 = vpop.f32.mrb[0].mxu0
    %608 = vmatprep.mubr.f32.mxu0 0.0
    %609 = vmatmul.mubr.f32.gmra.mrb[0].mxu0 %v515
    %v610 = vpop.f32.mrb[0].mxu0
    %v611 = vadd.f32 %v537, %v610
    %v612 = vpop.f32.mrb[0].mxu0
    %613 = vdwg.mxu0
    %614 = vst [vmem:[#allocation13] sm:$0xff] %v606
    %615 = vst [vmem:[#allocation13 + $0x8] sm:$0xff] %v611
    // Predicated region
    $region70: #{tpu_custom_call.1} parent=1 // pred_check
      _
    $region71: #{tpu_custom_call.1} parent=1 // pred_check_branch
      %617 = sbr.rel (0) target = $region73
    $region72: #{tpu_custom_call.1} parent=1 // pred_region
      %s619 = ssub.s32 256, 256
      %620 = vsyncadd [#allocation4], %s619
      %s621 = sshll.u32 [#allocation13], 4
      %s622 = int_to_ptr.vmem [resolvable:$true] %s621
      %627 = dma.vmem_to_hbm [thread:$0]  %s622, 256, %s11, [#allocation4], 128, 128, 8
    $region73: #{tpu_custom_call.1} parent=1 // pred_fallthru
      _
    // Predicated region
    $region74: #{tpu_custom_call.1} parent=1 // pred_check
      _
    $region75: #{tpu_custom_call.1} parent=1 // pred_check_branch
      %629 = sbr.rel (0) target = $region77
    $region76: #{tpu_custom_call.1} parent=1 // pred_region
      %630 = dma.done [#allocation4], 256
    $region77: #{tpu_custom_call.1} parent=1 // pred_fallthru
      _
    %631 = vsyncpa [#allocation3], 1
    %632 = vsyncpa [#allocation6], 1
    %633 = vsyncpa [#allocation9], 1
    %634 = vsyncpa [#allocation12], 1
    %635 = vsyncpa [#allocation4], 1

</llo_original>
